<compile_context>
chip_gen: v5e
topology: v5e:2x2
jax: 0.10.0
libtpu: 0.0.40
codegen_flags: <defaults>
</compile_context>

<pallas_src>
import math
import functools

import jax
import jax.numpy as jnp
from jax.experimental import pallas as pl
from jax.experimental.pallas import tpu as pltpu


# ----------------------------- Pallas kernel --------------------------------
def _iaf_kernel(*refs, num_input, has_context, scale, log_scale, mm_dtype,
                lane_dense_ld):
    if has_context:
        (x_ref, ctx_ref, w1_ref, wc_ref, b1_ref, wout_ref, bout_ref,
         z_ref, ld_ref) = refs
    else:
        (x_ref, w1_ref, b1_ref, wout_ref, bout_ref, z_ref, ld_ref) = refs
        ctx_ref = wc_ref = None

    D = num_input
    x = x_ref[...]                                            # (TB, D) f32, reused in z mix

    # --- MADE hidden layer: two MXU pushes into one f32 accumulator ---
    acc = jnp.dot(x.astype(mm_dtype), w1_ref[...],
                  preferred_element_type=jnp.float32)
    if has_context:
        acc = acc + jnp.dot(ctx_ref[...].astype(mm_dtype), wc_ref[...],
                            preferred_element_type=jnp.float32)
    h = jnp.maximum(acc + b1_ref[...], 0.0)                   # activation = ReLU

    # --- MADE output layer: one fused matmul for both heads, sliced in-kernel ---
    # TODO(synk): for large D not a multiple of 128, pad each head of w_out to a
    # 128-aligned width so the m|s split lands exactly on lane-tile boundaries.
    out = jnp.dot(h.astype(mm_dtype), wout_ref[...],
                  preferred_element_type=jnp.float32) + bout_ref[...]
    m = out[:, :D]
    s = out[:, D:]                                            # sigmoid_arg_bias already folded in

    # --- IAF LSTM-type update (Eq. 11-14 of 1606.04934), shared exp(-|s|) ---
    e = jnp.exp(-jnp.abs(s))                                  # single EUP exp
    inv = 1.0 / (1.0 + e)
    sig = jnp.where(s >= 0, inv, e * inv)                     # sigmoid(s), stable
    z = sig * x + (1.0 - sig) * m
    if scale != 1.0:                                          # scale==1.0 -> no extra ops
        z = z * jnp.float32(scale)
    z_ref[...] = z.astype(z_ref.dtype)

    # -log_sigmoid(s) = max(-s, 0) + log(1 + exp(-|s|))  (shares `e` above)
    nls = jnp.maximum(-s, 0.0) + jnp.log(1.0 + e)
    if lane_dense_ld:
        ld = jnp.sum(nls, axis=-1)                            # (TB,)
        if log_scale != 0.0:
            ld = ld - jnp.float32(D * log_scale)
        ld_ref[...] = ld[None, :]                             # (1, TB) lane-dense store
    else:
        ld = jnp.sum(nls, axis=-1, keepdims=True)             # (TB, 1) fallback layout
        if log_scale != 0.0:
            ld = ld - jnp.float32(D * log_scale)
        ld_ref[...] = ld


# --------------------- one-time parameter preparation ------------------------
def prepare_iaf_params(params, *, use_context=True, mm_dtype=jnp.float32):
    """Fuse MADE weights/biases ONCE, outside the per-call path.

    Produces: w1 (D,H), [wc (C,H)], b1 (1,H), w_out (H,2D)=[W2m|W2s],
              b_out (1,2D)=[b2m | b2s+sigmoid_arg_bias].
    Set mm_dtype=jnp.bfloat16 for the bf16-MXU path (biases stay f32).
    """
    w_out = jnp.concatenate([params["w2m"], params["w2s"]], axis=1)
    b_out = jnp.concatenate(
        [params["b2m"], params["b2s"] + params["sigmoid_arg_bias"]], axis=1)
    fused = dict(
        w1=params["w1"].astype(mm_dtype),
        b1=params["b1"].astype(jnp.float32),
        w_out=w_out.astype(mm_dtype),
        b_out=b_out.astype(jnp.float32),
    )
    if use_context:
        fused["wc"] = params["wc"].astype(mm_dtype)
    return fused


def _pick_block_b(B, sublane):
    """Largest divisor of B that is <=512, sublane-aligned, preferring >=2 grid
    steps (so v7x's two TensorCores both get batch tiles)."""
    cands = [b for b in range(sublane, min(B, 512) + 1, sublane) if B % b == 0]
    if not cands:
        return B                      # tiny batch: full-array block is always legal
    multi_step = [b for b in cands if B // b >= 2]
    return max(multi_step or cands)


# ------------------------------- wrapper --------------------------------------
def iaf_sample_and_log_prob(x, context, fused, *, scale=1.0, block_b=None):
    """IAF forward pass. Returns (z, log_det) with shapes (B, D), (B,)."""
    B, D = x.shape
    has_context = context is not None
    w1, b1, w_out, b_out = fused["w1"], fused["b1"], fused["w_out"], fused["b_out"]
    wc = fused.get("wc") if has_context else None
    if has_context:
        assert wc is not None, "fused params were prepared without context weights"
    H = w1.shape[-1]
    C = context.shape[-1] if has_context else 0
    mm_dtype = w1.dtype
    log_scale = float(math.log(scale))

    # ---- batch tiling: weights resident, activations pipeline over B ----
    sublane = 16 if mm_dtype == jnp.bfloat16 else 8
    if block_b is None:
        block_b = _pick_block_b(B, sublane)
    assert B % block_b == 0 and (block_b == B or block_b % 8 == 0), \
        "block_b must divide B and be a multiple of 8 (or equal B)"
    G = B // block_b

    # ---- explicit VMEM budget (resident weights + double-buffered act tiles) ----
    w_item = jnp.dtype(mm_dtype).itemsize
    weight_bytes = ((w1.size + (wc.size if has_context else 0) + w_out.size) * w_item
                    + (b1.size + b_out.size) * 4)
    act_tile_bytes = block_b * (2 * D + C + 1) * 4
    vmem_limit = int(min(max(2 * (weight_bytes + 2 * act_tile_bytes) + (8 << 20),
                             32 << 20), 100 << 20))

    # ---- advisory cost estimate so XLA schedules producers around the call ----
    cost = pl.CostEstimate(
        flops=int(2 * B * ((D + C) * H + H * 2 * D)),
        transcendentals=int(2 * B * D),
        bytes_accessed=int(weight_bytes + (B * (D + C) + B * D + B) * 4),
    )

    args = [x] + ([context] if has_context else []) \
        + [w1] + ([wc] if has_context else []) + [b1, w_out, b_out]

    batch_spec = lambda last: pl.BlockSpec((block_b, last), lambda i: (i, 0))

    last_err = None
    # Capability fallback ladder: (single-buffered resident weights, lane-dense ld).
    for single_buf, lane_dense in ((True, True), (False, True), (False, False)):
        try:
            if single_buf:
                resident = lambda a: pl.BlockSpec(a.shape, lambda i: (0, 0),
                                                  pipeline_mode=pl.Buffered(1))
            else:
                resident = lambda a: pl.BlockSpec(a.shape, lambda i: (0, 0))

            in_specs = [batch_spec(D)]
            if has_context:
                in_specs.append(batch_spec(C))
            in_specs.append(resident(w1))
            if has_context:
                in_specs.append(resident(wc))
            in_specs += [resident(b1), resident(w_out), resident(b_out)]

            if lane_dense:
                ld_shape = jax.ShapeDtypeStruct((G, block_b), jnp.float32)
                ld_spec = pl.BlockSpec((1, block_b), lambda i: (i, 0))
            else:
                ld_shape = jax.ShapeDtypeStruct((B, 1), jnp.float32)
                ld_spec = pl.BlockSpec((block_b, 1), lambda i: (i, 0))

            kernel = functools.partial(
                _iaf_kernel, num_input=D, has_context=has_context,
                scale=float(scale), log_scale=log_scale,
                mm_dtype=mm_dtype, lane_dense_ld=lane_dense)

            z, ld = pl.pallas_call(
                kernel,
                out_shape=(jax.ShapeDtypeStruct((B, D), jnp.float32), ld_shape),
                grid_spec=pltpu.PrefetchScalarGridSpec(
                    num_scalar_prefetch=0,
                    grid=(G,),
                    in_specs=in_specs,
                    out_specs=[batch_spec(D), ld_spec],
                ),
                compiler_params=pltpu.CompilerParams(
                    dimension_semantics=("parallel",),
                    vmem_limit_bytes=vmem_limit,
                ),
                cost_estimate=cost,
            )(*args)
            log_det = ld.reshape(B) if lane_dense else ld[:, 0]
            return z, log_det
        except Exception as err:   # capability fallback only (e.g. Buffered(1))
            last_err = err
    raise last_err


# --------------------------- parameter construction --------------------------
def make_made_params(key, num_input, num_context, num_hidden):
    """Deterministic synthetic MADE + IAF params with autoregressive masks folded in."""
    D, C, H = num_input, num_context, num_hidden
    k1, k2, k3, k4 = jax.random.split(key, 4)

    # MADE degrees: inputs 1..D, hidden degrees evenly tiled over 1..D-1.
    # TODO(synk): hidden_degrees / activation are fixed (tiled degrees, ReLU) here;
    # other configurations only change this synthetic-param builder, not the kernel.
    in_deg = jnp.arange(1, D + 1)                               # (D,)
    hid_deg = (jnp.arange(H) % max(D - 1, 1)) + 1               # (H,)
    out_deg = in_deg                                            # per head (m or s)

    mask1 = (hid_deg[None, :] >= in_deg[:, None]).astype(jnp.float32)   # (D, H)
    mask2 = (out_deg[None, :] > hid_deg[:, None]).astype(jnp.float32)   # (H, D)

    s1 = 1.0 / math.sqrt(D)
    s2 = 1.0 / math.sqrt(H)
    sc = 1.0 / math.sqrt(C)

    w1 = jax.random.normal(k1, (D, H), jnp.float32) * s1 * mask1
    wc = jax.random.normal(k2, (C, H), jnp.float32) * sc
    w2m = jax.random.normal(k3, (H, D), jnp.float32) * s2 * mask2
    w2s = jax.random.normal(k4, (H, D), jnp.float32) * s2 * mask2

    return dict(
        w1=w1, wc=wc, b1=jnp.zeros((1, H), jnp.float32),
        w2m=w2m, b2m=jnp.zeros((1, D), jnp.float32),
        w2s=w2s, b2s=jnp.zeros((1, D), jnp.float32),
        sigmoid_arg_bias=jnp.full((1, D), 2.0, jnp.float32),    # ones(D) * 2
    )


# ------------------------------ JAX reference --------------------------------
def reference(x, context, p, scale=1.0):
    h = jnp.maximum(x @ p["w1"] + context @ p["wc"] + p["b1"], 0.0)
    m = h @ p["w2m"] + p["b2m"]
    s = h @ p["w2s"] + p["b2s"] + p["sigmoid_arg_bias"]
    sig = jax.nn.sigmoid(s)
    z = sig * x + (1 - sig) * m
    log_det = jnp.sum(-jax.nn.log_sigmoid(s) - math.log(scale), axis=-1)
    return z * scale, log_det


# ---------------------------------- main -------------------------------------
if __name__ == "__main__":
    B, D, C, H = 8, 16, 8, 32           # batch, num_input, context dim, hidden_size
    key = jax.random.PRNGKey(0)
    kx, kc, kp = jax.random.split(key, 3)

    x = jax.random.normal(kx, (B, D), jnp.float32)
    ctx = jax.random.normal(kc, (B, C), jnp.float32)
    params = make_made_params(kp, D, C, H)

    # one-time weight fusion (hoisted out of the call path)
    fused = prepare_iaf_params(params, use_context=True, mm_dtype=jnp.float32)

    z, log_det = iaf_sample_and_log_prob(x, ctx, fused)
    z, log_det = jax.block_until_ready((z, log_det))

    z_ref, ld_ref = reference(x, ctx, params)
    assert z.shape == (B, D) and log_det.shape == (B,)
    assert jnp.allclose(z, z_ref, atol=1e-5, rtol=1e-5)
    assert jnp.allclose(log_det, ld_ref, atol=1e-5, rtol=1e-5)

    # TODO(synk): initialize_scale() (data-dependent scale calibration + param
    # mutation) is a host-side procedure, not part of the kernel; calibrate
    # outside and pass `scale=` to iaf_sample_and_log_prob.

    print("KERNEL_OK")
</pallas_src>

<mosaic_0001>
module attributes {stable_mosaic.version = 11 : i64} {
  func.func @_iaf_kernel(%arg0: i32, %arg1: memref<8x16xf32, #tpu.memory_space<vmem>>, %arg2: memref<8x8xf32, #tpu.memory_space<vmem>>, %arg3: memref<16x32xf32, #tpu.memory_space<vmem>>, %arg4: memref<8x32xf32, #tpu.memory_space<vmem>>, %arg5: memref<1x32xf32, #tpu.memory_space<vmem>>, %arg6: memref<32x32xf32, #tpu.memory_space<vmem>>, %arg7: memref<1x32xf32, #tpu.memory_space<vmem>>, %arg8: memref<8x16xf32, #tpu.memory_space<vmem>>, %arg9: memref<1x8xf32, #tpu.memory_space<vmem>>) attributes {dimension_semantics = [#tpu.dimension_semantics<parallel>], iteration_bounds = array<i64: 1>, scalar_prefetch = 0 : i64, scratch_operands = 0 : i64, tpu.core_type = #tpu.core_type<tc>, window_params = [{transform_indices = @transform_0, window_bounds = array<i64: 8, 16>}, {transform_indices = @transform_1, window_bounds = array<i64: 8, 8>}, {pipeline_mode = #tpu.pipeline_mode<synchronous>, transform_indices = @transform_2, window_bounds = array<i64: 16, 32>}, {pipeline_mode = #tpu.pipeline_mode<synchronous>, transform_indices = @transform_3, window_bounds = array<i64: 8, 32>}, {pipeline_mode = #tpu.pipeline_mode<synchronous>, transform_indices = @transform_4, window_bounds = array<i64: 1, 32>}, {pipeline_mode = #tpu.pipeline_mode<synchronous>, transform_indices = @transform_5, window_bounds = array<i64: 32, 32>}, {pipeline_mode = #tpu.pipeline_mode<synchronous>, transform_indices = @transform_6, window_bounds = array<i64: 1, 32>}, {transform_indices = @transform_7, window_bounds = array<i64: 8, 16>}, {transform_indices = @transform_8, window_bounds = array<i64: 1, 8>}]} {
    %c0 = arith.constant 0 : index
    %c0_0 = arith.constant 0 : index
    %0 = vector.load %arg1[%c0, %c0_0] : memref<8x16xf32, #tpu.memory_space<vmem>>, vector<8x16xf32>
    %c0_1 = arith.constant 0 : index
    %c0_2 = arith.constant 0 : index
    %1 = vector.load %arg3[%c0_1, %c0_2] : memref<16x32xf32, #tpu.memory_space<vmem>>, vector<16x32xf32>
    %cst = arith.constant dense<0.000000e+00> : vector<8x32xf32>
    %2 = tpu.matmul %0, %1, %cst {dimension_numbers = #tpu.dot_dimension_numbers<[1], [0], [0], [1], [0, 0, 1, 1], [], []>} : vector<8x16xf32>, vector<16x32xf32>, vector<8x32xf32> -> vector<8x32xf32>
    %c0_3 = arith.constant 0 : index
    %c0_4 = arith.constant 0 : index
    %3 = vector.load %arg2[%c0_3, %c0_4] : memref<8x8xf32, #tpu.memory_space<vmem>>, vector<8x8xf32>
    %c0_5 = arith.constant 0 : index
    %c0_6 = arith.constant 0 : index
    %4 = vector.load %arg4[%c0_5, %c0_6] : memref<8x32xf32, #tpu.memory_space<vmem>>, vector<8x32xf32>
    %cst_7 = arith.constant dense<0.000000e+00> : vector<8x32xf32>
    %5 = tpu.matmul %3, %4, %cst_7 {dimension_numbers = #tpu.dot_dimension_numbers<[1], [0], [0], [1], [0, 0, 1, 1], [], []>} : vector<8x8xf32>, vector<8x32xf32>, vector<8x32xf32> -> vector<8x32xf32>
    %6 = arith.addf %2, %5 : vector<8x32xf32>
    %c0_8 = arith.constant 0 : index
    %c0_9 = arith.constant 0 : index
    %7 = vector.load %arg5[%c0_8, %c0_9] : memref<1x32xf32, #tpu.memory_space<vmem>>, vector<1x32xf32>
    %8 = vector.broadcast %7 : vector<1x32xf32> to vector<8x32xf32>
    %9 = arith.addf %6, %8 : vector<8x32xf32>
    %cst_10 = arith.constant 0.000000e+00 : f32
    %10 = vector.broadcast %cst_10 : f32 to vector<8x32xf32>
    %11 = arith.maximumf %9, %10 : vector<8x32xf32>
    %c0_11 = arith.constant 0 : index
    %c0_12 = arith.constant 0 : index
    %12 = vector.load %arg6[%c0_11, %c0_12] : memref<32x32xf32, #tpu.memory_space<vmem>>, vector<32x32xf32>
    %cst_13 = arith.constant dense<0.000000e+00> : vector<8x32xf32>
    %13 = tpu.matmul %11, %12, %cst_13 {dimension_numbers = #tpu.dot_dimension_numbers<[1], [0], [0], [1], [0, 0, 1, 1], [], []>} : vector<8x32xf32>, vector<32x32xf32>, vector<8x32xf32> -> vector<8x32xf32>
    %c0_14 = arith.constant 0 : index
    %c0_15 = arith.constant 0 : index
    %14 = vector.load %arg7[%c0_14, %c0_15] : memref<1x32xf32, #tpu.memory_space<vmem>>, vector<1x32xf32>
    %15 = vector.broadcast %14 : vector<1x32xf32> to vector<8x32xf32>
    %16 = arith.addf %13, %15 : vector<8x32xf32>
    %17 = vector.extract_strided_slice %16 {offsets = [0, 0], sizes = [8, 16], strides = [1, 1]} : vector<8x32xf32> to vector<8x16xf32>
    %18 = vector.extract_strided_slice %16 {offsets = [0, 16], sizes = [8, 16], strides = [1, 1]} : vector<8x32xf32> to vector<8x16xf32>
    %19 = math.absf %18 : vector<8x16xf32>
    %cst_16 = arith.constant 0.000000e+00 : f32
    %20 = vector.broadcast %cst_16 : f32 to vector<8x16xf32>
    %21 = arith.subf %20, %19 : vector<8x16xf32>
    %22 = math.exp %21 : vector<8x16xf32>
    %cst_17 = arith.constant 1.000000e+00 : f32
    %23 = vector.broadcast %cst_17 : f32 to vector<8x16xf32>
    %24 = arith.addf %23, %22 : vector<8x16xf32>
    %cst_18 = arith.constant 1.000000e+00 : f32
    %25 = vector.broadcast %cst_18 : f32 to vector<8x16xf32>
    %26 = arith.divf %25, %24 : vector<8x16xf32>
    %cst_19 = arith.constant 0.000000e+00 : f32
    %27 = vector.broadcast %cst_19 : f32 to vector<8x16xf32>
    %28 = arith.cmpf oge, %18, %27 : vector<8x16xf32>
    %29 = arith.mulf %22, %26 : vector<8x16xf32>
    %30 = arith.select %28, %26, %29 : vector<8x16xi1>, vector<8x16xf32>
    %31 = arith.mulf %30, %0 : vector<8x16xf32>
    %cst_20 = arith.constant 1.000000e+00 : f32
    %32 = vector.broadcast %cst_20 : f32 to vector<8x16xf32>
    %33 = arith.subf %32, %30 : vector<8x16xf32>
    %34 = arith.mulf %33, %17 : vector<8x16xf32>
    %35 = arith.addf %31, %34 : vector<8x16xf32>
    %c0_21 = arith.constant 0 : index
    %c0_22 = arith.constant 0 : index
    %36 = vector.load %arg8[%c0_21, %c0_22] : memref<8x16xf32, #tpu.memory_space<vmem>>, vector<8x16xf32>
    tpu.vector_store %arg8[%c0_21, %c0_22], %35 {strides = array<i32>} : memref<8x16xf32, #tpu.memory_space<vmem>>, vector<8x16xf32>,
    %cst_23 = arith.constant 0.000000e+00 : f32
    %37 = vector.broadcast %cst_23 : f32 to vector<8x16xf32>
    %38 = arith.subf %37, %18 : vector<8x16xf32>
    %cst_24 = arith.constant 0.000000e+00 : f32
    %39 = vector.broadcast %cst_24 : f32 to vector<8x16xf32>
    %40 = arith.maximumf %38, %39 : vector<8x16xf32>
    %cst_25 = arith.constant 1.000000e+00 : f32
    %41 = vector.broadcast %cst_25 : f32 to vector<8x16xf32>
    %42 = arith.addf %41, %22 : vector<8x16xf32>
    %43 = math.log %42 : vector<8x16xf32>
    %44 = arith.addf %40, %43 : vector<8x16xf32>
    %cst_26 = arith.constant dense<0.000000e+00> : vector<8xf32>
    %45 = vector.multi_reduction <add>, %44, %cst_26 [1] : vector<8x16xf32> to vector<8xf32>
    %46 = vector.shape_cast %45 : vector<8xf32> to vector<1x8xf32>
    %c0_27 = arith.constant 0 : index
    %c0_28 = arith.constant 0 : index
    %47 = vector.load %arg9[%c0_27, %c0_28] : memref<1x8xf32, #tpu.memory_space<vmem>>, vector<1x8xf32>
    tpu.vector_store %arg9[%c0_27, %c0_28], %46 {strides = array<i32>} : memref<1x8xf32, #tpu.memory_space<vmem>>, vector<1x8xf32>,
    return
  }
  func.func @transform_0(%arg0: i32) -> (i32, i32) {
    %c0_i32 = arith.constant 0 : i32
    %c0_i32_0 = arith.constant 0 : i32
    return %arg0, %c0_i32 : i32, i32
  }
  func.func @transform_1(%arg0: i32) -> (i32, i32) {
    %c0_i32 = arith.constant 0 : i32
    %c0_i32_0 = arith.constant 0 : i32
    return %arg0, %c0_i32 : i32, i32
  }
  func.func @transform_2(%arg0: i32) -> (i32, i32) {
    %c0_i32 = arith.constant 0 : i32
    %c0_i32_0 = arith.constant 0 : i32
    %c0_i32_1 = arith.constant 0 : i32
    return %c0_i32, %c0_i32_0 : i32, i32
  }
  func.func @transform_3(%arg0: i32) -> (i32, i32) {
    %c0_i32 = arith.constant 0 : i32
    %c0_i32_0 = arith.constant 0 : i32
    %c0_i32_1 = arith.constant 0 : i32
    return %c0_i32, %c0_i32_0 : i32, i32
  }
  func.func @transform_4(%arg0: i32) -> (i32, i32) {
    %c0_i32 = arith.constant 0 : i32
    %c0_i32_0 = arith.constant 0 : i32
    %c0_i32_1 = arith.constant 0 : i32
    return %c0_i32, %c0_i32_0 : i32, i32
  }
  func.func @transform_5(%arg0: i32) -> (i32, i32) {
    %c0_i32 = arith.constant 0 : i32
    %c0_i32_0 = arith.constant 0 : i32
    %c0_i32_1 = arith.constant 0 : i32
    return %c0_i32, %c0_i32_0 : i32, i32
  }
  func.func @transform_6(%arg0: i32) -> (i32, i32) {
    %c0_i32 = arith.constant 0 : i32
    %c0_i32_0 = arith.constant 0 : i32
    %c0_i32_1 = arith.constant 0 : i32
    return %c0_i32, %c0_i32_0 : i32, i32
  }
  func.func @transform_7(%arg0: i32) -> (i32, i32) {
    %c0_i32 = arith.constant 0 : i32
    %c0_i32_0 = arith.constant 0 : i32
    return %arg0, %c0_i32 : i32, i32
  }
  func.func @transform_8(%arg0: i32) -> (i32, i32) {
    %c0_i32 = arith.constant 0 : i32
    %c0_i32_0 = arith.constant 0 : i32
    return %arg0, %c0_i32 : i32, i32
  }
}

module attributes {stable_mosaic.version = 11 : i64} {
  func.func @_iaf_kernel(%arg0: i32, %arg1: memref<8x16xf32, #tpu.memory_space<vmem>>, %arg2: memref<8x8xf32, #tpu.memory_space<vmem>>, %arg3: memref<16x32xf32, #tpu.memory_space<vmem>>, %arg4: memref<8x32xf32, #tpu.memory_space<vmem>>, %arg5: memref<1x32xf32, #tpu.memory_space<vmem>>, %arg6: memref<32x32xf32, #tpu.memory_space<vmem>>, %arg7: memref<1x32xf32, #tpu.memory_space<vmem>>, %arg8: memref<8x16xf32, #tpu.memory_space<vmem>>, %arg9: memref<1x8xf32, #tpu.memory_space<vmem>>) attributes {dimension_semantics = [#tpu.dimension_semantics<parallel>], iteration_bounds = array<i64: 1>, scalar_prefetch = 0 : i64, scratch_operands = 0 : i64, tpu.core_type = #tpu.core_type<tc>, window_params = [{transform_indices = @transform_0, window_bounds = array<i64: 8, 16>}, {transform_indices = @transform_1, window_bounds = array<i64: 8, 8>}, {pipeline_mode = #tpu.pipeline_mode<synchronous>, transform_indices = @transform_2, window_bounds = array<i64: 16, 32>}, {pipeline_mode = #tpu.pipeline_mode<synchronous>, transform_indices = @transform_3, window_bounds = array<i64: 8, 32>}, {pipeline_mode = #tpu.pipeline_mode<synchronous>, transform_indices = @transform_4, window_bounds = array<i64: 1, 32>}, {pipeline_mode = #tpu.pipeline_mode<synchronous>, transform_indices = @transform_5, window_bounds = array<i64: 32, 32>}, {pipeline_mode = #tpu.pipeline_mode<synchronous>, transform_indices = @transform_6, window_bounds = array<i64: 1, 32>}, {transform_indices = @transform_7, window_bounds = array<i64: 8, 16>}, {transform_indices = @transform_8, window_bounds = array<i64: 1, 8>}]} {
    %c0 = arith.constant 0 : index
    %c0_0 = arith.constant 0 : index
    %0 = vector.load %arg1[%c0, %c0_0] : memref<8x16xf32, #tpu.memory_space<vmem>>, vector<8x16xf32>
    %c0_1 = arith.constant 0 : index
    %c0_2 = arith.constant 0 : index
    %1 = vector.load %arg3[%c0_1, %c0_2] : memref<16x32xf32, #tpu.memory_space<vmem>>, vector<16x32xf32>
    %cst = arith.constant dense<0.000000e+00> : vector<8x32xf32>
    %2 = tpu.matmul %0, %1, %cst {dimension_numbers = #tpu.dot_dimension_numbers<[1], [0], [0], [1], [0, 0, 1, 1], [], []>} : vector<8x16xf32>, vector<16x32xf32>, vector<8x32xf32> -> vector<8x32xf32>
    %c0_3 = arith.constant 0 : index
    %c0_4 = arith.constant 0 : index
    %3 = vector.load %arg2[%c0_3, %c0_4] : memref<8x8xf32, #tpu.memory_space<vmem>>, vector<8x8xf32>
    %c0_5 = arith.constant 0 : index
    %c0_6 = arith.constant 0 : index
    %4 = vector.load %arg4[%c0_5, %c0_6] : memref<8x32xf32, #tpu.memory_space<vmem>>, vector<8x32xf32>
    %cst_7 = arith.constant dense<0.000000e+00> : vector<8x32xf32>
    %5 = tpu.matmul %3, %4, %cst_7 {dimension_numbers = #tpu.dot_dimension_numbers<[1], [0], [0], [1], [0, 0, 1, 1], [], []>} : vector<8x8xf32>, vector<8x32xf32>, vector<8x32xf32> -> vector<8x32xf32>
    %6 = arith.addf %2, %5 : vector<8x32xf32>
    %c0_8 = arith.constant 0 : index
    %c0_9 = arith.constant 0 : index
    %7 = vector.load %arg5[%c0_8, %c0_9] : memref<1x32xf32, #tpu.memory_space<vmem>>, vector<1x32xf32>
    %8 = vector.broadcast %7 : vector<1x32xf32> to vector<8x32xf32>
    %9 = arith.addf %6, %8 : vector<8x32xf32>
    %cst_10 = arith.constant 0.000000e+00 : f32
    %10 = vector.broadcast %cst_10 : f32 to vector<8x32xf32>
    %11 = arith.maximumf %9, %10 : vector<8x32xf32>
    %c0_11 = arith.constant 0 : index
    %c0_12 = arith.constant 0 : index
    %12 = vector.load %arg6[%c0_11, %c0_12] : memref<32x32xf32, #tpu.memory_space<vmem>>, vector<32x32xf32>
    %cst_13 = arith.constant dense<0.000000e+00> : vector<8x32xf32>
    %13 = tpu.matmul %11, %12, %cst_13 {dimension_numbers = #tpu.dot_dimension_numbers<[1], [0], [0], [1], [0, 0, 1, 1], [], []>} : vector<8x32xf32>, vector<32x32xf32>, vector<8x32xf32> -> vector<8x32xf32>
    %c0_14 = arith.constant 0 : index
    %c0_15 = arith.constant 0 : index
    %14 = vector.load %arg7[%c0_14, %c0_15] : memref<1x32xf32, #tpu.memory_space<vmem>>, vector<1x32xf32>
    %15 = vector.broadcast %14 : vector<1x32xf32> to vector<8x32xf32>
    %16 = arith.addf %13, %15 : vector<8x32xf32>
    %17 = vector.extract_strided_slice %16 {offsets = [0, 0], sizes = [8, 16], strides = [1, 1]} : vector<8x32xf32> to vector<8x16xf32>
    %18 = vector.extract_strided_slice %16 {offsets = [0, 16], sizes = [8, 16], strides = [1, 1]} : vector<8x32xf32> to vector<8x16xf32>
    %19 = math.absf %18 : vector<8x16xf32>
    %cst_16 = arith.constant 0.000000e+00 : f32
    %20 = vector.broadcast %cst_16 : f32 to vector<8x16xf32>
    %21 = arith.subf %20, %19 : vector<8x16xf32>
    %22 = math.exp %21 : vector<8x16xf32>
    %cst_17 = arith.constant 1.000000e+00 : f32
    %23 = vector.broadcast %cst_17 : f32 to vector<8x16xf32>
    %24 = arith.addf %23, %22 : vector<8x16xf32>
    %cst_18 = arith.constant 1.000000e+00 : f32
    %25 = vector.broadcast %cst_18 : f32 to vector<8x16xf32>
    %26 = arith.divf %25, %24 : vector<8x16xf32>
    %cst_19 = arith.constant 0.000000e+00 : f32
    %27 = vector.broadcast %cst_19 : f32 to vector<8x16xf32>
    %28 = arith.cmpf oge, %18, %27 : vector<8x16xf32>
    %29 = arith.mulf %22, %26 : vector<8x16xf32>
    %30 = arith.select %28, %26, %29 : vector<8x16xi1>, vector<8x16xf32>
    %31 = arith.mulf %30, %0 : vector<8x16xf32>
    %cst_20 = arith.constant 1.000000e+00 : f32
    %32 = vector.broadcast %cst_20 : f32 to vector<8x16xf32>
    %33 = arith.subf %32, %30 : vector<8x16xf32>
    %34 = arith.mulf %33, %17 : vector<8x16xf32>
    %35 = arith.addf %31, %34 : vector<8x16xf32>
    %c0_21 = arith.constant 0 : index
    %c0_22 = arith.constant 0 : index
    %36 = vector.load %arg8[%c0_21, %c0_22] : memref<8x16xf32, #tpu.memory_space<vmem>>, vector<8x16xf32>
    tpu.vector_store %arg8[%c0_21, %c0_22], %35 {strides = array<i32>} : memref<8x16xf32, #tpu.memory_space<vmem>>, vector<8x16xf32>,
    %cst_23 = arith.constant 0.000000e+00 : f32
    %37 = vector.broadcast %cst_23 : f32 to vector<8x16xf32>
    %38 = arith.subf %37, %18 : vector<8x16xf32>
    %cst_24 = arith.constant 0.000000e+00 : f32
    %39 = vector.broadcast %cst_24 : f32 to vector<8x16xf32>
    %40 = arith.maximumf %38, %39 : vector<8x16xf32>
    %cst_25 = arith.constant 1.000000e+00 : f32
    %41 = vector.broadcast %cst_25 : f32 to vector<8x16xf32>
    %42 = arith.addf %41, %22 : vector<8x16xf32>
    %43 = math.log %42 : vector<8x16xf32>
    %44 = arith.addf %40, %43 : vector<8x16xf32>
    %cst_26 = arith.constant dense<0.000000e+00> : vector<8xf32>
    %45 = vector.multi_reduction <add>, %44, %cst_26 [1] : vector<8x16xf32> to vector<8xf32>
    %46 = vector.shape_cast %45 : vector<8xf32> to vector<1x8xf32>
    %c0_27 = arith.constant 0 : index
    %c0_28 = arith.constant 0 : index
    %47 = vector.load %arg9[%c0_27, %c0_28] : memref<1x8xf32, #tpu.memory_space<vmem>>, vector<1x8xf32>
    tpu.vector_store %arg9[%c0_27, %c0_28], %46 {strides = array<i32>} : memref<1x8xf32, #tpu.memory_space<vmem>>, vector<1x8xf32>,
    return
  }
  func.func @transform_0(%arg0: i32) -> (i32, i32) {
    %c0_i32 = arith.constant 0 : i32
    %c0_i32_0 = arith.constant 0 : i32
    return %arg0, %c0_i32 : i32, i32
  }
  func.func @transform_1(%arg0: i32) -> (i32, i32) {
    %c0_i32 = arith.constant 0 : i32
    %c0_i32_0 = arith.constant 0 : i32
    return %arg0, %c0_i32 : i32, i32
  }
  func.func @transform_2(%arg0: i32) -> (i32, i32) {
    %c0_i32 = arith.constant 0 : i32
    %c0_i32_0 = arith.constant 0 : i32
    %c0_i32_1 = arith.constant 0 : i32
    return %c0_i32, %c0_i32_0 : i32, i32
  }
  func.func @transform_3(%arg0: i32) -> (i32, i32) {
    %c0_i32 = arith.constant 0 : i32
    %c0_i32_0 = arith.constant 0 : i32
    %c0_i32_1 = arith.constant 0 : i32
    return %c0_i32, %c0_i32_0 : i32, i32
  }
  func.func @transform_4(%arg0: i32) -> (i32, i32) {
    %c0_i32 = arith.constant 0 : i32
    %c0_i32_0 = arith.constant 0 : i32
    %c0_i32_1 = arith.constant 0 : i32
    return %c0_i32, %c0_i32_0 : i32, i32
  }
  func.func @transform_5(%arg0: i32) -> (i32, i32) {
    %c0_i32 = arith.constant 0 : i32
    %c0_i32_0 = arith.constant 0 : i32
    %c0_i32_1 = arith.constant 0 : i32
    return %c0_i32, %c0_i32_0 : i32, i32
  }
  func.func @transform_6(%arg0: i32) -> (i32, i32) {
    %c0_i32 = arith.constant 0 : i32
    %c0_i32_0 = arith.constant 0 : i32
    %c0_i32_1 = arith.constant 0 : i32
    return %c0_i32, %c0_i32_0 : i32, i32
  }
  func.func @transform_7(%arg0: i32) -> (i32, i32) {
    %c0_i32 = arith.constant 0 : i32
    %c0_i32_0 = arith.constant 0 : i32
    return %arg0, %c0_i32 : i32, i32
  }
  func.func @transform_8(%arg0: i32) -> (i32, i32) {
    %c0_i32 = arith.constant 0 : i32
    %c0_i32_0 = arith.constant 0 : i32
    return %arg0, %c0_i32 : i32, i32
  }
}

module attributes {stable_mosaic.version = 11 : i64} {
  func.func @_iaf_kernel(%arg0: i32, %arg1: memref<8x16xf32, #tpu.memory_space<vmem>>, %arg2: memref<8x8xf32, #tpu.memory_space<vmem>>, %arg3: memref<16x32xf32, #tpu.memory_space<vmem>>, %arg4: memref<8x32xf32, #tpu.memory_space<vmem>>, %arg5: memref<1x32xf32, #tpu.memory_space<vmem>>, %arg6: memref<32x32xf32, #tpu.memory_space<vmem>>, %arg7: memref<1x32xf32, #tpu.memory_space<vmem>>, %arg8: memref<8x16xf32, #tpu.memory_space<vmem>>, %arg9: memref<8x1xf32, #tpu.memory_space<vmem>>) attributes {dimension_semantics = [#tpu.dimension_semantics<parallel>], iteration_bounds = array<i64: 1>, scalar_prefetch = 0 : i64, scratch_operands = 0 : i64, tpu.core_type = #tpu.core_type<tc>, window_params = [{transform_indices = @transform_0, window_bounds = array<i64: 8, 16>}, {transform_indices = @transform_1, window_bounds = array<i64: 8, 8>}, {pipeline_mode = #tpu.pipeline_mode<synchronous>, transform_indices = @transform_2, window_bounds = array<i64: 16, 32>}, {pipeline_mode = #tpu.pipeline_mode<synchronous>, transform_indices = @transform_3, window_bounds = array<i64: 8, 32>}, {pipeline_mode = #tpu.pipeline_mode<synchronous>, transform_indices = @transform_4, window_bounds = array<i64: 1, 32>}, {pipeline_mode = #tpu.pipeline_mode<synchronous>, transform_indices = @transform_5, window_bounds = array<i64: 32, 32>}, {pipeline_mode = #tpu.pipeline_mode<synchronous>, transform_indices = @transform_6, window_bounds = array<i64: 1, 32>}, {transform_indices = @transform_7, window_bounds = array<i64: 8, 16>}, {transform_indices = @transform_8, window_bounds = array<i64: 8, 1>}]} {
    %c0 = arith.constant 0 : index
    %c0_0 = arith.constant 0 : index
    %0 = vector.load %arg1[%c0, %c0_0] : memref<8x16xf32, #tpu.memory_space<vmem>>, vector<8x16xf32>
    %c0_1 = arith.constant 0 : index
    %c0_2 = arith.constant 0 : index
    %1 = vector.load %arg3[%c0_1, %c0_2] : memref<16x32xf32, #tpu.memory_space<vmem>>, vector<16x32xf32>
    %cst = arith.constant dense<0.000000e+00> : vector<8x32xf32>
    %2 = tpu.matmul %0, %1, %cst {dimension_numbers = #tpu.dot_dimension_numbers<[1], [0], [0], [1], [0, 0, 1, 1], [], []>} : vector<8x16xf32>, vector<16x32xf32>, vector<8x32xf32> -> vector<8x32xf32>
    %c0_3 = arith.constant 0 : index
    %c0_4 = arith.constant 0 : index
    %3 = vector.load %arg2[%c0_3, %c0_4] : memref<8x8xf32, #tpu.memory_space<vmem>>, vector<8x8xf32>
    %c0_5 = arith.constant 0 : index
    %c0_6 = arith.constant 0 : index
    %4 = vector.load %arg4[%c0_5, %c0_6] : memref<8x32xf32, #tpu.memory_space<vmem>>, vector<8x32xf32>
    %cst_7 = arith.constant dense<0.000000e+00> : vector<8x32xf32>
    %5 = tpu.matmul %3, %4, %cst_7 {dimension_numbers = #tpu.dot_dimension_numbers<[1], [0], [0], [1], [0, 0, 1, 1], [], []>} : vector<8x8xf32>, vector<8x32xf32>, vector<8x32xf32> -> vector<8x32xf32>
    %6 = arith.addf %2, %5 : vector<8x32xf32>
    %c0_8 = arith.constant 0 : index
    %c0_9 = arith.constant 0 : index
    %7 = vector.load %arg5[%c0_8, %c0_9] : memref<1x32xf32, #tpu.memory_space<vmem>>, vector<1x32xf32>
    %8 = vector.broadcast %7 : vector<1x32xf32> to vector<8x32xf32>
    %9 = arith.addf %6, %8 : vector<8x32xf32>
    %cst_10 = arith.constant 0.000000e+00 : f32
    %10 = vector.broadcast %cst_10 : f32 to vector<8x32xf32>
    %11 = arith.maximumf %9, %10 : vector<8x32xf32>
    %c0_11 = arith.constant 0 : index
    %c0_12 = arith.constant 0 : index
    %12 = vector.load %arg6[%c0_11, %c0_12] : memref<32x32xf32, #tpu.memory_space<vmem>>, vector<32x32xf32>
    %cst_13 = arith.constant dense<0.000000e+00> : vector<8x32xf32>
    %13 = tpu.matmul %11, %12, %cst_13 {dimension_numbers = #tpu.dot_dimension_numbers<[1], [0], [0], [1], [0, 0, 1, 1], [], []>} : vector<8x32xf32>, vector<32x32xf32>, vector<8x32xf32> -> vector<8x32xf32>
    %c0_14 = arith.constant 0 : index
    %c0_15 = arith.constant 0 : index
    %14 = vector.load %arg7[%c0_14, %c0_15] : memref<1x32xf32, #tpu.memory_space<vmem>>, vector<1x32xf32>
    %15 = vector.broadcast %14 : vector<1x32xf32> to vector<8x32xf32>
    %16 = arith.addf %13, %15 : vector<8x32xf32>
    %17 = vector.extract_strided_slice %16 {offsets = [0, 0], sizes = [8, 16], strides = [1, 1]} : vector<8x32xf32> to vector<8x16xf32>
    %18 = vector.extract_strided_slice %16 {offsets = [0, 16], sizes = [8, 16], strides = [1, 1]} : vector<8x32xf32> to vector<8x16xf32>
    %19 = math.absf %18 : vector<8x16xf32>
    %cst_16 = arith.constant 0.000000e+00 : f32
    %20 = vector.broadcast %cst_16 : f32 to vector<8x16xf32>
    %21 = arith.subf %20, %19 : vector<8x16xf32>
    %22 = math.exp %21 : vector<8x16xf32>
    %cst_17 = arith.constant 1.000000e+00 : f32
    %23 = vector.broadcast %cst_17 : f32 to vector<8x16xf32>
    %24 = arith.addf %23, %22 : vector<8x16xf32>
    %cst_18 = arith.constant 1.000000e+00 : f32
    %25 = vector.broadcast %cst_18 : f32 to vector<8x16xf32>
    %26 = arith.divf %25, %24 : vector<8x16xf32>
    %cst_19 = arith.constant 0.000000e+00 : f32
    %27 = vector.broadcast %cst_19 : f32 to vector<8x16xf32>
    %28 = arith.cmpf oge, %18, %27 : vector<8x16xf32>
    %29 = arith.mulf %22, %26 : vector<8x16xf32>
    %30 = arith.select %28, %26, %29 : vector<8x16xi1>, vector<8x16xf32>
    %31 = arith.mulf %30, %0 : vector<8x16xf32>
    %cst_20 = arith.constant 1.000000e+00 : f32
    %32 = vector.broadcast %cst_20 : f32 to vector<8x16xf32>
    %33 = arith.subf %32, %30 : vector<8x16xf32>
    %34 = arith.mulf %33, %17 : vector<8x16xf32>
    %35 = arith.addf %31, %34 : vector<8x16xf32>
    %c0_21 = arith.constant 0 : index
    %c0_22 = arith.constant 0 : index
    %36 = vector.load %arg8[%c0_21, %c0_22] : memref<8x16xf32, #tpu.memory_space<vmem>>, vector<8x16xf32>
    tpu.vector_store %arg8[%c0_21, %c0_22], %35 {strides = array<i32>} : memref<8x16xf32, #tpu.memory_space<vmem>>, vector<8x16xf32>,
    %cst_23 = arith.constant 0.000000e+00 : f32
    %37 = vector.broadcast %cst_23 : f32 to vector<8x16xf32>
    %38 = arith.subf %37, %18 : vector<8x16xf32>
    %cst_24 = arith.constant 0.000000e+00 : f32
    %39 = vector.broadcast %cst_24 : f32 to vector<8x16xf32>
    %40 = arith.maximumf %38, %39 : vector<8x16xf32>
    %cst_25 = arith.constant 1.000000e+00 : f32
    %41 = vector.broadcast %cst_25 : f32 to vector<8x16xf32>
    %42 = arith.addf %41, %22 : vector<8x16xf32>
    %43 = math.log %42 : vector<8x16xf32>
    %44 = arith.addf %40, %43 : vector<8x16xf32>
    %cst_26 = arith.constant dense<0.000000e+00> : vector<8xf32>
    %45 = vector.multi_reduction <add>, %44, %cst_26 [1] : vector<8x16xf32> to vector<8xf32>
    %46 = vector.shape_cast %45 : vector<8xf32> to vector<8x1xf32>
    %c0_27 = arith.constant 0 : index
    %c0_28 = arith.constant 0 : index
    %47 = vector.load %arg9[%c0_27, %c0_28] : memref<8x1xf32, #tpu.memory_space<vmem>>, vector<8x1xf32>
    tpu.vector_store %arg9[%c0_27, %c0_28], %46 {strides = array<i32>} : memref<8x1xf32, #tpu.memory_space<vmem>>, vector<8x1xf32>,
    return
  }
  func.func @transform_0(%arg0: i32) -> (i32, i32) {
    %c0_i32 = arith.constant 0 : i32
    %c0_i32_0 = arith.constant 0 : i32
    return %arg0, %c0_i32 : i32, i32
  }
  func.func @transform_1(%arg0: i32) -> (i32, i32) {
    %c0_i32 = arith.constant 0 : i32
    %c0_i32_0 = arith.constant 0 : i32
    return %arg0, %c0_i32 : i32, i32
  }
  func.func @transform_2(%arg0: i32) -> (i32, i32) {
    %c0_i32 = arith.constant 0 : i32
    %c0_i32_0 = arith.constant 0 : i32
    %c0_i32_1 = arith.constant 0 : i32
    return %c0_i32, %c0_i32_0 : i32, i32
  }
  func.func @transform_3(%arg0: i32) -> (i32, i32) {
    %c0_i32 = arith.constant 0 : i32
    %c0_i32_0 = arith.constant 0 : i32
    %c0_i32_1 = arith.constant 0 : i32
    return %c0_i32, %c0_i32_0 : i32, i32
  }
  func.func @transform_4(%arg0: i32) -> (i32, i32) {
    %c0_i32 = arith.constant 0 : i32
    %c0_i32_0 = arith.constant 0 : i32
    %c0_i32_1 = arith.constant 0 : i32
    return %c0_i32, %c0_i32_0 : i32, i32
  }
  func.func @transform_5(%arg0: i32) -> (i32, i32) {
    %c0_i32 = arith.constant 0 : i32
    %c0_i32_0 = arith.constant 0 : i32
    %c0_i32_1 = arith.constant 0 : i32
    return %c0_i32, %c0_i32_0 : i32, i32
  }
  func.func @transform_6(%arg0: i32) -> (i32, i32) {
    %c0_i32 = arith.constant 0 : i32
    %c0_i32_0 = arith.constant 0 : i32
    %c0_i32_1 = arith.constant 0 : i32
    return %c0_i32, %c0_i32_0 : i32, i32
  }
  func.func @transform_7(%arg0: i32) -> (i32, i32) {
    %c0_i32 = arith.constant 0 : i32
    %c0_i32_0 = arith.constant 0 : i32
    return %arg0, %c0_i32 : i32, i32
  }
  func.func @transform_8(%arg0: i32) -> (i32, i32) {
    %c0_i32 = arith.constant 0 : i32
    %c0_i32_0 = arith.constant 0 : i32
    return %arg0, %c0_i32 : i32, i32
  }
}

</mosaic_0001>

<llo_original>
// kernel: tpu_custom_call.1
$region0: #{tpu_custom_call.1}
  #allocation0 [shape = 'u32[]', space=smem, size = 0x4, offset = 0x4, fixed_abs, tag = 'smem constant byte address 0x4 - core index']
  #allocation1 [shape = 'u32[72,128]{1,0:T(1,128)}', space=vmem, size = 0x9000, scoped, tag = 'internal scratch']
  %s0 = inlined_call_operand.hbm [shape: f32[8,16], index: 0, kind: input, shape index: {}]
  %s1 = inlined_call_operand.hbm [shape: f32[8,8], index: 1, kind: input, shape index: {}]
  %s2 = inlined_call_operand.hbm [shape: f32[16,32], index: 2, kind: input, shape index: {}]
  %s3 = inlined_call_operand.hbm [shape: f32[8,32], index: 3, kind: input, shape index: {}]
  %s4 = inlined_call_operand.vmem [shape: f32[1,32], index: 4, kind: input, shape index: {}]
  %s5 = inlined_call_operand.hbm [shape: f32[32,32], index: 5, kind: input, shape index: {}]
  %s6 = inlined_call_operand.vmem [shape: f32[1,32], index: 6, kind: input, shape index: {}]
  %s7 = inlined_call_operand.hbm [shape: f32[8,16], index: 7, kind: output, shape index: {0}]
  %s8 = inlined_call_operand.hbm [shape: f32[1,8], index: 8, kind: output, shape index: {1}]
  %9 = xla_tuple %s7, %s8
  %s10 = sld [smem:[#allocation0]]
  $region66: #{tpu_custom_call.1} parent=0
    _
  %s12 = ssub.s32 1, %s10
  %s13 = scalar_select 0, %s12, %s10
  $region1: #{tpu_custom_call.1} parent=0
    #allocation2 [shape = 'u8[4096]{0}', space=vmem, size = 0x1000, scoped, tag = 'input window, operand 0, single buffered']
    #allocation3 [shape = 's32[1]{0}', space=sflag, size = 0x4, scoped, tag = 'scoped memory for tpu_custom_call.1']
    #allocation4 [shape = 's32[1]{0}', space=sflag, size = 0x4, scoped, tag = 'scoped memory for tpu_custom_call.1']
    #allocation5 [shape = 'u8[4096]{0}', space=vmem, size = 0x1000, scoped, tag = 'input window, operand 1, single buffered']
    #allocation6 [shape = 's32[1]{0}', space=sflag, size = 0x4, scoped, tag = 'scoped memory for tpu_custom_call.1']
    #allocation7 [shape = 'u8[8192]{0}', space=vmem, size = 0x2000, scoped, tag = 'input window, operand 2, single buffered']
    #allocation8 [shape = 'u8[4096]{0}', space=vmem, size = 0x1000, scoped, tag = 'input window, operand 3, single buffered']
    #allocation9 [shape = 's32[1]{0}', space=sflag, size = 0x4, scoped, tag = 'scoped memory for tpu_custom_call.1']
    #allocation10 [shape = 'u8[16384]{0}', space=vmem, size = 0x4000, scoped, tag = 'input window, operand 5, single buffered']
    #allocation11 [shape = 'u8[4096]{0}', space=vmem, size = 0x1000, scoped, tag = 'output window, operand 0, single buffered']
    #allocation12 [shape = 'u8[512]{0}', space=vmem, size = 0x400, scoped, tag = 'output window, operand 1, single buffered']
    #allocation13 [shape = 's32[1]{0}', space=sflag, size = 0x4, scoped, tag = 'scoped memory for tpu_custom_call.1']
    %14 = vsyncpa [#allocation3], 0
    %15 = vsyncpa [#allocation6], 0
    %16 = vsyncpa [#allocation9], 0
    %17 = vsyncpa [#allocation4], 0
    %18 = vsyncpa [#allocation13], 0
    // Predicated region
    $region2: #{tpu_custom_call.1} parent=1 // pred_check
      _
    $region3: #{tpu_custom_call.1} parent=1 // pred_check_branch
      %20 = sbr.rel (0) target = $region5
    $region4: #{tpu_custom_call.1} parent=1 // pred_region
      %22 = vsyncadd [#allocation3], 0
      %s24 = sshll.u32 %s0, 4
      %s25 = int_to_ptr.hbm [resolvable:$true] %s24
      %s26 = sshll.u32 [#allocation2], 4
      %s27 = int_to_ptr.vmem [resolvable:$true] %s26
      %29 = dma.hbm_to_vmem [thread:$0]  %s25, 128, %s27, [#allocation3]
    $region5: #{tpu_custom_call.1} parent=1 // pred_fallthru
      _
    // Predicated region
    $region6: #{tpu_custom_call.1} parent=1 // pred_check
      _
    $region7: #{tpu_custom_call.1} parent=1 // pred_check_branch
      %31 = sbr.rel (0) target = $region9
    $region8: #{tpu_custom_call.1} parent=1 // pred_region
      %33 = vsyncadd [#allocation6], 0
      %s35 = sshll.u32 %s1, 4
      %s36 = int_to_ptr.hbm [resolvable:$true] %s35
      %s37 = sshll.u32 [#allocation5], 4
      %s38 = int_to_ptr.vmem [resolvable:$true] %s37
      %40 = dma.hbm_to_vmem [thread:$0]  %s36, 128, %s38, [#allocation6]
    $region9: #{tpu_custom_call.1} parent=1 // pred_fallthru
      _
    // Predicated region
    $region10: #{tpu_custom_call.1} parent=1 // pred_check
      _
    $region11: #{tpu_custom_call.1} parent=1 // pred_check_branch
      %42 = sbr.rel (0) target = $region13
    $region12: #{tpu_custom_call.1} parent=1 // pred_region
      %44 = vsyncadd [#allocation6], 0
      %s45 = sshll.u32 %s2, 4
      %s46 = int_to_ptr.hbm [resolvable:$true] %s45
      %s47 = sshll.u32 [#allocation7], 4
      %s48 = int_to_ptr.vmem [resolvable:$true] %s47
      %53 = dma.hbm_to_vmem [thread:$0]  %s46, 256, %s48, [#allocation6], 128, 128, 8
    $region13: #{tpu_custom_call.1} parent=1 // pred_fallthru
      _
    // Predicated region
    $region14: #{tpu_custom_call.1} parent=1 // pred_check
      _
    $region15: #{tpu_custom_call.1} parent=1 // pred_check_branch
      %55 = sbr.rel (0) target = $region17
    $region16: #{tpu_custom_call.1} parent=1 // pred_region
      %57 = vsyncadd [#allocation9], 0
      %s59 = sshll.u32 %s3, 4
      %s60 = int_to_ptr.hbm [resolvable:$true] %s59
      %s61 = sshll.u32 [#allocation8], 4
      %s62 = int_to_ptr.vmem [resolvable:$true] %s61
      %64 = dma.hbm_to_vmem [thread:$0]  %s60, 128, %s62, [#allocation9]
    $region17: #{tpu_custom_call.1} parent=1 // pred_fallthru
      _
    // Predicated region
    $region18: #{tpu_custom_call.1} parent=1 // pred_check
      _
    $region19: #{tpu_custom_call.1} parent=1 // pred_check_branch
      %66 = sbr.rel (0) target = $region21
    $region20: #{tpu_custom_call.1} parent=1 // pred_region
      _
    $region21: #{tpu_custom_call.1} parent=1 // pred_fallthru
      _
    // Predicated region
    $region22: #{tpu_custom_call.1} parent=1 // pred_check
      _
    $region23: #{tpu_custom_call.1} parent=1 // pred_check_branch
      %68 = sbr.rel (0) target = $region25
    $region24: #{tpu_custom_call.1} parent=1 // pred_region
      %70 = vsyncadd [#allocation9], 0
      %s71 = sshll.u32 %s5, 4
      %s72 = int_to_ptr.hbm [resolvable:$true] %s71
      %s73 = sshll.u32 [#allocation10], 4
      %s74 = int_to_ptr.vmem [resolvable:$true] %s73
      %79 = dma.hbm_to_vmem [thread:$0]  %s72, 512, %s74, [#allocation9], 128, 128, 8
    $region25: #{tpu_custom_call.1} parent=1 // pred_fallthru
      _
    // Predicated region
    $region26: #{tpu_custom_call.1} parent=1 // pred_check
      _
    $region27: #{tpu_custom_call.1} parent=1 // pred_check_branch
      %81 = sbr.rel (0) target = $region29
    $region28: #{tpu_custom_call.1} parent=1 // pred_region
      _
    $region29: #{tpu_custom_call.1} parent=1 // pred_fallthru
      _
    // Predicated region
    $region30: #{tpu_custom_call.1} parent=1 // pred_check
      _
    $region31: #{tpu_custom_call.1} parent=1 // pred_check_branch
      %83 = sbr.rel (0) target = $region33
    $region32: #{tpu_custom_call.1} parent=1 // pred_region
      %85 = dma.done [#allocation3], 128
    $region33: #{tpu_custom_call.1} parent=1 // pred_fallthru
      _
    // Predicated region
    $region34: #{tpu_custom_call.1} parent=1 // pred_check
      _
    $region35: #{tpu_custom_call.1} parent=1 // pred_check_branch
      %87 = sbr.rel (0) target = $region37
    $region36: #{tpu_custom_call.1} parent=1 // pred_region
      %89 = dma.done [#allocation6], 128
    $region37: #{tpu_custom_call.1} parent=1 // pred_fallthru
      _
    // Predicated region
    $region38: #{tpu_custom_call.1} parent=1 // pred_check
      _
    $region39: #{tpu_custom_call.1} parent=1 // pred_check_branch
      %91 = sbr.rel (0) target = $region41
    $region40: #{tpu_custom_call.1} parent=1 // pred_region
      %93 = dma.done [#allocation6], 256
    $region41: #{tpu_custom_call.1} parent=1 // pred_fallthru
      _
    // Predicated region
    $region42: #{tpu_custom_call.1} parent=1 // pred_check
      _
    $region43: #{tpu_custom_call.1} parent=1 // pred_check_branch
      %95 = sbr.rel (0) target = $region45
    $region44: #{tpu_custom_call.1} parent=1 // pred_region
      %97 = dma.done [#allocation9], 128
    $region45: #{tpu_custom_call.1} parent=1 // pred_fallthru
      _
    // Predicated region
    $region46: #{tpu_custom_call.1} parent=1 // pred_check
      _
    $region47: #{tpu_custom_call.1} parent=1 // pred_check_branch
      %99 = sbr.rel (0) target = $region49
    $region48: #{tpu_custom_call.1} parent=1 // pred_region
      %101 = dma.done [#allocation9], 512
    $region49: #{tpu_custom_call.1} parent=1 // pred_fallthru
      _
    %v102 = vld [vmem:[#allocation2] sm:$0xff]
    %v103 = vld [vmem:[#allocation7] sm:$0xff]
    %v104 = vld [vmem:[#allocation7 + $0x8] sm:$0xff]
    %v105 = vld [vmem:[#allocation5] sm:$0xff]
    %v106 = vld [vmem:[#allocation8] sm:$0xff]
    %vm107 = vcmask 64512
    %v109 = vsel %vm107, %v105, 0
    %111 = vmatpush.msra.mxu0 0.0
    %112 = vmatpush.msra.mxu0 0.0
    %113 = vmatpush.msra.mxu0 0.0
    %114 = vmatpush.msra.mxu0 0.0
    %115 = vmatpush.msra.mxu0 0.0
    %116 = vmatpush.msra.mxu0 0.0
    %117 = vmatpush.msra.mxu0 0.0
    %118 = vmatpush.msra.mxu0 0.0
    %119 = vmatpush.msra.mxu0 0.0
    %120 = vmatpush.msra.mxu0 0.0
    %121 = vmatpush.msra.mxu0 0.0
    %122 = vmatpush.msra.mxu0 0.0
    %123 = vmatpush.msra.mxu0 0.0
    %124 = vmatpush.msra.mxu0 0.0
    %125 = vmatpush.msra.mxu0 0.0
    %126 = vmatpush.msra.mxu0 %v106
    %127 = vmatmul.f32.gmra.mxu0 %v109
    %v128 = vpop.f32.mrf.mxu0
    %v129 = vadd.f32 0.0, %v128
    %130 = vdwg.mxu0
    %vm131 = vcmask 130048
    %v133 = vsel %vm131, %v102, 0
    %135 = vmatpush.msra.mxu0 0.0
    %136 = vmatpush.msra.mxu0 0.0
    %137 = vmatpush.msra.mxu0 0.0
    %138 = vmatpush.msra.mxu0 0.0
    %139 = vmatpush.msra.mxu0 0.0
    %140 = vmatpush.msra.mxu0 0.0
    %141 = vmatpush.msra.mxu0 0.0
    %142 = vmatpush.msra.mxu0 0.0
    %143 = vmatpush.msra.mxu0 0.0
    %144 = vmatpush.msra.mxu0 0.0
    %145 = vmatpush.msra.mxu0 0.0
    %146 = vmatpush.msra.mxu0 0.0
    %147 = vmatpush.msra.mxu0 0.0
    %148 = vmatpush.msra.mxu0 0.0
    %149 = vmatpush.msra.mxu0 %v104
    %150 = vmatpush.msra.mxu0 %v103
    %151 = vmatmul.f32.gmra.mxu0 %v133
    %v152 = vpop.f32.mrf.mxu0
    %v153 = vadd.f32 %v129, %v152
    %154 = vdwg.mxu0
    %v155 = vld [vmem:[%s4] sm:$0x1]
    %v157 = vperm.slane %v155, 0
    %v159 = vadd.f32 %v153, %v157
    %v160 = vmax.f32 %v159, 0.0
    %v161 = vld [vmem:[#allocation10] sm:$0xff]
    %v162 = vld [vmem:[#allocation10 + $0x8] sm:$0xff]
    %v163 = vld [vmem:[#allocation10 + $0x10] sm:$0xff]
    %v164 = vld [vmem:[#allocation10 + $0x18] sm:$0xff]
    %v165 = vld [vmem:[%s6] sm:$0x1]
    %v167 = vperm.slane %v165, 0
    %vm169 = vcmask 261120
    %v171 = vsel %vm169, %v160, 0
    %173 = vmatpush.msra.mxu0 0.0
    %174 = vmatpush.msra.mxu0 0.0
    %175 = vmatpush.msra.mxu0 0.0
    %176 = vmatpush.msra.mxu0 0.0
    %177 = vmatpush.msra.mxu0 0.0
    %178 = vmatpush.msra.mxu0 0.0
    %179 = vmatpush.msra.mxu0 0.0
    %180 = vmatpush.msra.mxu0 0.0
    %181 = vmatpush.msra.mxu0 0.0
    %182 = vmatpush.msra.mxu0 0.0
    %183 = vmatpush.msra.mxu0 0.0
    %184 = vmatpush.msra.mxu0 0.0
    %185 = vmatpush.msra.mxu0 %v164
    %186 = vmatpush.msra.mxu0 %v163
    %187 = vmatpush.msra.mxu0 %v162
    %188 = vmatpush.msra.mxu0 %v161
    %189 = vmatmul.f32.gmra.mxu0 %v171
    %v190 = vpop.f32.mrf.mxu0
    %v191 = vadd.f32 %v167, %v190
    %192 = vdwg.mxu0
    %v193 = vand.u32 2147483647, %v191
    %v194 = vsub.f32 0.0, %v193
    %v195 = vmul.f32 %v194, 1.442695
    %v196 = vpow.pop %v195
    %v197 = vadd.f32 %v196, 1.0
    %v198 = vrcp.pop %v197
    %v199 = vmul.f32 %v197, %v198
    %v200 = vsub.f32 1.0, %v199
    %v201 = vmul.f32 %v198, %v200
    %v202 = vadd.f32 %v198, %v201
    %vm203 = vweird.f32 %v197
    %vm204 = vweird.f32 %v198
    %vm205 = vmor %vm203, %vm204
    %v206 = vsel %vm205, %v198, %v202
    %v207 = vand.u32 2147483647, %v197
    %vm208 = vcmp.eq.f32.partialorder %v207, 8.507059e+37
    %v209 = vand.u32 %v197, 2147483648
    %v210 = vor.u32 1.1754944e-38, %v209
    %v211 = vsel %vm208, %v210, %v206
    %v212 = vmul.f32 1.0, %v211
    %vm213 = vcmp.ge.f32.partialorder %v191, 0.0
    %v214 = vmul.f32 %v196, %v212
    %v215 = vsel %vm213, %v212, %v214
    %216 = vrot.lane.b32.xlu0 %v102, 16
    %v217 = vpop.permute.xlu0 %216
    %v219 = vmul.f32 %v215, %v217
    %v220 = vsub.f32 1.0, %v215
    %222 = vrot.lane.b32.xlu0 %v191, 16
    %v223 = vpop.permute.xlu0 %222
    %v225 = vmul.f32 %v220, %v223
    %v226 = vadd.f32 %v219, %v225
    %228 = vrot.lane.b32.xlu0 %v226, 112
    %v229 = vpop.permute.xlu0 %228
    %231 = vst.msk [vmem:[#allocation11] sm:$0xff] %vm131, %v229
    %v232 = vsub.f32 0.0, %v191
    %v233 = vmax.f32 %v232, 0.0
    %v234 = vlog2.pop %v197
    %v235 = vmul.f32 %v234, 0.6931472
    %v236 = vadd.f32 %v233, %v235
    %238 = vrot.lane.b32.xlu0 %v236, 112
    %v239 = vpop.permute.xlu0 %238
    %v241 = vsel %vm131, %v239, 0.0
    %242 = vadd.xlane.f32.xlu0 %v241
    %v243 = vpop.xlane.xlu0 %242
    %v245 = vlaneseq
    %v246 = vand.u32 %v245, 127
    %v247 = vperm.slane %v243, %v246
    %vm249 = vcmask 57344
    %250 = vst.msk [vmem:[#allocation12] sm:$0x1] %vm249, %v247
    // Predicated region
    $region50: #{tpu_custom_call.1} parent=1 // pred_check
      _
    $region51: #{tpu_custom_call.1} parent=1 // pred_check_branch
      %252 = sbr.rel (0) target = $region53
    $region52: #{tpu_custom_call.1} parent=1 // pred_region
      %254 = vsyncadd [#allocation4], 0
      %s256 = sshll.u32 [#allocation11], 4
      %s257 = int_to_ptr.vmem [resolvable:$true] %s256
      %s258 = sshll.u32 %s7, 4
      %s259 = int_to_ptr.hbm [resolvable:$true] %s258
      %261 = dma.vmem_to_hbm [thread:$0]  %s257, 128, %s259, [#allocation4]
    $region53: #{tpu_custom_call.1} parent=1 // pred_fallthru
      _
    // Predicated region
    $region54: #{tpu_custom_call.1} parent=1 // pred_check
      _
    $region55: #{tpu_custom_call.1} parent=1 // pred_check_branch
      %263 = sbr.rel (0) target = $region57
    $region56: #{tpu_custom_call.1} parent=1 // pred_region
      %265 = vsyncadd [#allocation13], 0
      %s267 = sshll.u32 [#allocation12], 4
      %s268 = int_to_ptr.vmem [resolvable:$true] %s267
      %s269 = sshll.u32 %s8, 4
      %s270 = int_to_ptr.hbm [resolvable:$true] %s269
      %272 = dma.vmem_to_hbm [thread:$0]  %s268, 16, %s270, [#allocation13]
    $region57: #{tpu_custom_call.1} parent=1 // pred_fallthru
      _
    // Predicated region
    $region58: #{tpu_custom_call.1} parent=1 // pred_check
      _
    $region59: #{tpu_custom_call.1} parent=1 // pred_check_branch
      %274 = sbr.rel (0) target = $region61
    $region60: #{tpu_custom_call.1} parent=1 // pred_region
      %276 = dma.done [#allocation4], 128
    $region61: #{tpu_custom_call.1} parent=1 // pred_fallthru
      _
    // Predicated region
    $region62: #{tpu_custom_call.1} parent=1 // pred_check
      _
    $region63: #{tpu_custom_call.1} parent=1 // pred_check_branch
      %278 = sbr.rel (0) target = $region65
    $region64: #{tpu_custom_call.1} parent=1 // pred_region
      %280 = dma.done [#allocation13], 16
    $region65: #{tpu_custom_call.1} parent=1 // pred_fallthru
      _
    %281 = vsyncpa [#allocation3], 1
    %282 = vsyncpa [#allocation6], 1
    %283 = vsyncpa [#allocation9], 1
    %284 = vsyncpa [#allocation4], 1
    %285 = vsyncpa [#allocation13], 1

// kernel: tpu_custom_call.1
$region0: #{tpu_custom_call.1}
  #allocation0 [shape = 'u32[]', space=smem, size = 0x4, offset = 0x4, fixed_abs, tag = 'smem constant byte address 0x4 - core index']
  #allocation1 [shape = 'u32[72,128]{1,0:T(1,128)}', space=vmem, size = 0x9000, scoped, tag = 'internal scratch']
  %s0 = inlined_call_operand.hbm [shape: f32[8,16], index: 0, kind: input, shape index: {}]
  %s1 = inlined_call_operand.hbm [shape: f32[8,8], index: 1, kind: input, shape index: {}]
  %s2 = inlined_call_operand.hbm [shape: f32[16,32], index: 2, kind: input, shape index: {}]
  %s3 = inlined_call_operand.hbm [shape: f32[8,32], index: 3, kind: input, shape index: {}]
  %s4 = inlined_call_operand.vmem [shape: f32[1,32], index: 4, kind: input, shape index: {}]
  %s5 = inlined_call_operand.hbm [shape: f32[32,32], index: 5, kind: input, shape index: {}]
  %s6 = inlined_call_operand.vmem [shape: f32[1,32], index: 6, kind: input, shape index: {}]
  %s7 = inlined_call_operand.hbm [shape: f32[8,16], index: 7, kind: output, shape index: {0}]
  %s8 = inlined_call_operand.hbm [shape: f32[1,8], index: 8, kind: output, shape index: {1}]
  %9 = xla_tuple %s7, %s8
  %s10 = sld [smem:[#allocation0]]
  $region66: #{tpu_custom_call.1} parent=0
    _
  %s12 = ssub.s32 1, %s10
  %s13 = scalar_select 0, %s12, %s10
  $region1: #{tpu_custom_call.1} parent=0
    #allocation2 [shape = 'u8[4096]{0}', space=vmem, size = 0x1000, scoped, tag = 'input window, operand 0, single buffered']
    #allocation3 [shape = 's32[1]{0}', space=sflag, size = 0x4, scoped, tag = 'scoped memory for tpu_custom_call.1']
    #allocation4 [shape = 's32[1]{0}', space=sflag, size = 0x4, scoped, tag = 'scoped memory for tpu_custom_call.1']
    #allocation5 [shape = 'u8[4096]{0}', space=vmem, size = 0x1000, scoped, tag = 'input window, operand 1, single buffered']
    #allocation6 [shape = 's32[1]{0}', space=sflag, size = 0x4, scoped, tag = 'scoped memory for tpu_custom_call.1']
    #allocation7 [shape = 'u8[8192]{0}', space=vmem, size = 0x2000, scoped, tag = 'input window, operand 2, single buffered']
    #allocation8 [shape = 'u8[4096]{0}', space=vmem, size = 0x1000, scoped, tag = 'input window, operand 3, single buffered']
    #allocation9 [shape = 's32[1]{0}', space=sflag, size = 0x4, scoped, tag = 'scoped memory for tpu_custom_call.1']
    #allocation10 [shape = 'u8[16384]{0}', space=vmem, size = 0x4000, scoped, tag = 'input window, operand 5, single buffered']
    #allocation11 [shape = 'u8[4096]{0}', space=vmem, size = 0x1000, scoped, tag = 'output window, operand 0, single buffered']
    #allocation12 [shape = 'u8[512]{0}', space=vmem, size = 0x400, scoped, tag = 'output window, operand 1, single buffered']
    #allocation13 [shape = 's32[1]{0}', space=sflag, size = 0x4, scoped, tag = 'scoped memory for tpu_custom_call.1']
    %14 = vsyncpa [#allocation3], 0
    %15 = vsyncpa [#allocation6], 0
    %16 = vsyncpa [#allocation9], 0
    %17 = vsyncpa [#allocation4], 0
    %18 = vsyncpa [#allocation13], 0
    // Predicated region
    $region2: #{tpu_custom_call.1} parent=1 // pred_check
      _
    $region3: #{tpu_custom_call.1} parent=1 // pred_check_branch
      %20 = sbr.rel (0) target = $region5
    $region4: #{tpu_custom_call.1} parent=1 // pred_region
      %22 = vsyncadd [#allocation3], 0
      %s24 = sshll.u32 %s0, 4
      %s25 = int_to_ptr.hbm [resolvable:$true] %s24
      %s26 = sshll.u32 [#allocation2], 4
      %s27 = int_to_ptr.vmem [resolvable:$true] %s26
      %29 = dma.hbm_to_vmem [thread:$0]  %s25, 128, %s27, [#allocation3]
    $region5: #{tpu_custom_call.1} parent=1 // pred_fallthru
      _
    // Predicated region
    $region6: #{tpu_custom_call.1} parent=1 // pred_check
      _
    $region7: #{tpu_custom_call.1} parent=1 // pred_check_branch
      %31 = sbr.rel (0) target = $region9
    $region8: #{tpu_custom_call.1} parent=1 // pred_region
      %33 = vsyncadd [#allocation6], 0
      %s35 = sshll.u32 %s1, 4
      %s36 = int_to_ptr.hbm [resolvable:$true] %s35
      %s37 = sshll.u32 [#allocation5], 4
      %s38 = int_to_ptr.vmem [resolvable:$true] %s37
      %40 = dma.hbm_to_vmem [thread:$0]  %s36, 128, %s38, [#allocation6]
    $region9: #{tpu_custom_call.1} parent=1 // pred_fallthru
      _
    // Predicated region
    $region10: #{tpu_custom_call.1} parent=1 // pred_check
      _
    $region11: #{tpu_custom_call.1} parent=1 // pred_check_branch
      %42 = sbr.rel (0) target = $region13
    $region12: #{tpu_custom_call.1} parent=1 // pred_region
      %44 = vsyncadd [#allocation6], 0
      %s45 = sshll.u32 %s2, 4
      %s46 = int_to_ptr.hbm [resolvable:$true] %s45
      %s47 = sshll.u32 [#allocation7], 4
      %s48 = int_to_ptr.vmem [resolvable:$true] %s47
      %53 = dma.hbm_to_vmem [thread:$0]  %s46, 256, %s48, [#allocation6], 128, 128, 8
    $region13: #{tpu_custom_call.1} parent=1 // pred_fallthru
      _
    // Predicated region
    $region14: #{tpu_custom_call.1} parent=1 // pred_check
      _
    $region15: #{tpu_custom_call.1} parent=1 // pred_check_branch
      %55 = sbr.rel (0) target = $region17
    $region16: #{tpu_custom_call.1} parent=1 // pred_region
      %57 = vsyncadd [#allocation9], 0
      %s59 = sshll.u32 %s3, 4
      %s60 = int_to_ptr.hbm [resolvable:$true] %s59
      %s61 = sshll.u32 [#allocation8], 4
      %s62 = int_to_ptr.vmem [resolvable:$true] %s61
      %64 = dma.hbm_to_vmem [thread:$0]  %s60, 128, %s62, [#allocation9]
    $region17: #{tpu_custom_call.1} parent=1 // pred_fallthru
      _
    // Predicated region
    $region18: #{tpu_custom_call.1} parent=1 // pred_check
      _
    $region19: #{tpu_custom_call.1} parent=1 // pred_check_branch
      %66 = sbr.rel (0) target = $region21
    $region20: #{tpu_custom_call.1} parent=1 // pred_region
      _
    $region21: #{tpu_custom_call.1} parent=1 // pred_fallthru
      _
    // Predicated region
    $region22: #{tpu_custom_call.1} parent=1 // pred_check
      _
    $region23: #{tpu_custom_call.1} parent=1 // pred_check_branch
      %68 = sbr.rel (0) target = $region25
    $region24: #{tpu_custom_call.1} parent=1 // pred_region
      %70 = vsyncadd [#allocation9], 0
      %s71 = sshll.u32 %s5, 4
      %s72 = int_to_ptr.hbm [resolvable:$true] %s71
      %s73 = sshll.u32 [#allocation10], 4
      %s74 = int_to_ptr.vmem [resolvable:$true] %s73
      %79 = dma.hbm_to_vmem [thread:$0]  %s72, 512, %s74, [#allocation9], 128, 128, 8
    $region25: #{tpu_custom_call.1} parent=1 // pred_fallthru
      _
    // Predicated region
    $region26: #{tpu_custom_call.1} parent=1 // pred_check
      _
    $region27: #{tpu_custom_call.1} parent=1 // pred_check_branch
      %81 = sbr.rel (0) target = $region29
    $region28: #{tpu_custom_call.1} parent=1 // pred_region
      _
    $region29: #{tpu_custom_call.1} parent=1 // pred_fallthru
      _
    // Predicated region
    $region30: #{tpu_custom_call.1} parent=1 // pred_check
      _
    $region31: #{tpu_custom_call.1} parent=1 // pred_check_branch
      %83 = sbr.rel (0) target = $region33
    $region32: #{tpu_custom_call.1} parent=1 // pred_region
      %85 = dma.done [#allocation3], 128
    $region33: #{tpu_custom_call.1} parent=1 // pred_fallthru
      _
    // Predicated region
    $region34: #{tpu_custom_call.1} parent=1 // pred_check
      _
    $region35: #{tpu_custom_call.1} parent=1 // pred_check_branch
      %87 = sbr.rel (0) target = $region37
    $region36: #{tpu_custom_call.1} parent=1 // pred_region
      %89 = dma.done [#allocation6], 128
    $region37: #{tpu_custom_call.1} parent=1 // pred_fallthru
      _
    // Predicated region
    $region38: #{tpu_custom_call.1} parent=1 // pred_check
      _
    $region39: #{tpu_custom_call.1} parent=1 // pred_check_branch
      %91 = sbr.rel (0) target = $region41
    $region40: #{tpu_custom_call.1} parent=1 // pred_region
      %93 = dma.done [#allocation6], 256
    $region41: #{tpu_custom_call.1} parent=1 // pred_fallthru
      _
    // Predicated region
    $region42: #{tpu_custom_call.1} parent=1 // pred_check
      _
    $region43: #{tpu_custom_call.1} parent=1 // pred_check_branch
      %95 = sbr.rel (0) target = $region45
    $region44: #{tpu_custom_call.1} parent=1 // pred_region
      %97 = dma.done [#allocation9], 128
    $region45: #{tpu_custom_call.1} parent=1 // pred_fallthru
      _
    // Predicated region
    $region46: #{tpu_custom_call.1} parent=1 // pred_check
      _
    $region47: #{tpu_custom_call.1} parent=1 // pred_check_branch
      %99 = sbr.rel (0) target = $region49
    $region48: #{tpu_custom_call.1} parent=1 // pred_region
      %101 = dma.done [#allocation9], 512
    $region49: #{tpu_custom_call.1} parent=1 // pred_fallthru
      _
    %v102 = vld [vmem:[#allocation2] sm:$0xff]
    %v103 = vld [vmem:[#allocation7] sm:$0xff]
    %v104 = vld [vmem:[#allocation7 + $0x8] sm:$0xff]
    %v105 = vld [vmem:[#allocation5] sm:$0xff]
    %v106 = vld [vmem:[#allocation8] sm:$0xff]
    %vm107 = vcmask 64512
    %v109 = vsel %vm107, %v105, 0
    %111 = vmatpush.msra.mxu0 0.0
    %112 = vmatpush.msra.mxu0 0.0
    %113 = vmatpush.msra.mxu0 0.0
    %114 = vmatpush.msra.mxu0 0.0
    %115 = vmatpush.msra.mxu0 0.0
    %116 = vmatpush.msra.mxu0 0.0
    %117 = vmatpush.msra.mxu0 0.0
    %118 = vmatpush.msra.mxu0 0.0
    %119 = vmatpush.msra.mxu0 0.0
    %120 = vmatpush.msra.mxu0 0.0
    %121 = vmatpush.msra.mxu0 0.0
    %122 = vmatpush.msra.mxu0 0.0
    %123 = vmatpush.msra.mxu0 0.0
    %124 = vmatpush.msra.mxu0 0.0
    %125 = vmatpush.msra.mxu0 0.0
    %126 = vmatpush.msra.mxu0 %v106
    %127 = vmatmul.f32.gmra.mxu0 %v109
    %v128 = vpop.f32.mrf.mxu0
    %v129 = vadd.f32 0.0, %v128
    %130 = vdwg.mxu0
    %vm131 = vcmask 130048
    %v133 = vsel %vm131, %v102, 0
    %135 = vmatpush.msra.mxu0 0.0
    %136 = vmatpush.msra.mxu0 0.0
    %137 = vmatpush.msra.mxu0 0.0
    %138 = vmatpush.msra.mxu0 0.0
    %139 = vmatpush.msra.mxu0 0.0
    %140 = vmatpush.msra.mxu0 0.0
    %141 = vmatpush.msra.mxu0 0.0
    %142 = vmatpush.msra.mxu0 0.0
    %143 = vmatpush.msra.mxu0 0.0
    %144 = vmatpush.msra.mxu0 0.0
    %145 = vmatpush.msra.mxu0 0.0
    %146 = vmatpush.msra.mxu0 0.0
    %147 = vmatpush.msra.mxu0 0.0
    %148 = vmatpush.msra.mxu0 0.0
    %149 = vmatpush.msra.mxu0 %v104
    %150 = vmatpush.msra.mxu0 %v103
    %151 = vmatmul.f32.gmra.mxu0 %v133
    %v152 = vpop.f32.mrf.mxu0
    %v153 = vadd.f32 %v129, %v152
    %154 = vdwg.mxu0
    %v155 = vld [vmem:[%s4] sm:$0x1]
    %v157 = vperm.slane %v155, 0
    %v159 = vadd.f32 %v153, %v157
    %v160 = vmax.f32 %v159, 0.0
    %v161 = vld [vmem:[#allocation10] sm:$0xff]
    %v162 = vld [vmem:[#allocation10 + $0x8] sm:$0xff]
    %v163 = vld [vmem:[#allocation10 + $0x10] sm:$0xff]
    %v164 = vld [vmem:[#allocation10 + $0x18] sm:$0xff]
    %v165 = vld [vmem:[%s6] sm:$0x1]
    %v167 = vperm.slane %v165, 0
    %vm169 = vcmask 261120
    %v171 = vsel %vm169, %v160, 0
    %173 = vmatpush.msra.mxu0 0.0
    %174 = vmatpush.msra.mxu0 0.0
    %175 = vmatpush.msra.mxu0 0.0
    %176 = vmatpush.msra.mxu0 0.0
    %177 = vmatpush.msra.mxu0 0.0
    %178 = vmatpush.msra.mxu0 0.0
    %179 = vmatpush.msra.mxu0 0.0
    %180 = vmatpush.msra.mxu0 0.0
    %181 = vmatpush.msra.mxu0 0.0
    %182 = vmatpush.msra.mxu0 0.0
    %183 = vmatpush.msra.mxu0 0.0
    %184 = vmatpush.msra.mxu0 0.0
    %185 = vmatpush.msra.mxu0 %v164
    %186 = vmatpush.msra.mxu0 %v163
    %187 = vmatpush.msra.mxu0 %v162
    %188 = vmatpush.msra.mxu0 %v161
    %189 = vmatmul.f32.gmra.mxu0 %v171
    %v190 = vpop.f32.mrf.mxu0
    %v191 = vadd.f32 %v167, %v190
    %192 = vdwg.mxu0
    %v193 = vand.u32 2147483647, %v191
    %v194 = vsub.f32 0.0, %v193
    %v195 = vmul.f32 %v194, 1.442695
    %v196 = vpow.pop %v195
    %v197 = vadd.f32 %v196, 1.0
    %v198 = vrcp.pop %v197
    %v199 = vmul.f32 %v197, %v198
    %v200 = vsub.f32 1.0, %v199
    %v201 = vmul.f32 %v198, %v200
    %v202 = vadd.f32 %v198, %v201
    %vm203 = vweird.f32 %v197
    %vm204 = vweird.f32 %v198
    %vm205 = vmor %vm203, %vm204
    %v206 = vsel %vm205, %v198, %v202
    %v207 = vand.u32 2147483647, %v197
    %vm208 = vcmp.eq.f32.partialorder %v207, 8.507059e+37
    %v209 = vand.u32 %v197, 2147483648
    %v210 = vor.u32 1.1754944e-38, %v209
    %v211 = vsel %vm208, %v210, %v206
    %v212 = vmul.f32 1.0, %v211
    %vm213 = vcmp.ge.f32.partialorder %v191, 0.0
    %v214 = vmul.f32 %v196, %v212
    %v215 = vsel %vm213, %v212, %v214
    %216 = vrot.lane.b32.xlu0 %v102, 16
    %v217 = vpop.permute.xlu0 %216
    %v219 = vmul.f32 %v215, %v217
    %v220 = vsub.f32 1.0, %v215
    %222 = vrot.lane.b32.xlu0 %v191, 16
    %v223 = vpop.permute.xlu0 %222
    %v225 = vmul.f32 %v220, %v223
    %v226 = vadd.f32 %v219, %v225
    %228 = vrot.lane.b32.xlu0 %v226, 112
    %v229 = vpop.permute.xlu0 %228
    %231 = vst.msk [vmem:[#allocation11] sm:$0xff] %vm131, %v229
    %v232 = vsub.f32 0.0, %v191
    %v233 = vmax.f32 %v232, 0.0
    %v234 = vlog2.pop %v197
    %v235 = vmul.f32 %v234, 0.6931472
    %v236 = vadd.f32 %v233, %v235
    %238 = vrot.lane.b32.xlu0 %v236, 112
    %v239 = vpop.permute.xlu0 %238
    %v241 = vsel %vm131, %v239, 0.0
    %242 = vadd.xlane.f32.xlu0 %v241
    %v243 = vpop.xlane.xlu0 %242
    %v245 = vlaneseq
    %v246 = vand.u32 %v245, 127
    %v247 = vperm.slane %v243, %v246
    %vm249 = vcmask 57344
    %250 = vst.msk [vmem:[#allocation12] sm:$0x1] %vm249, %v247
    // Predicated region
    $region50: #{tpu_custom_call.1} parent=1 // pred_check
      _
    $region51: #{tpu_custom_call.1} parent=1 // pred_check_branch
      %252 = sbr.rel (0) target = $region53
    $region52: #{tpu_custom_call.1} parent=1 // pred_region
      %254 = vsyncadd [#allocation4], 0
      %s256 = sshll.u32 [#allocation11], 4
      %s257 = int_to_ptr.vmem [resolvable:$true] %s256
      %s258 = sshll.u32 %s7, 4
      %s259 = int_to_ptr.hbm [resolvable:$true] %s258
      %261 = dma.vmem_to_hbm [thread:$0]  %s257, 128, %s259, [#allocation4]
    $region53: #{tpu_custom_call.1} parent=1 // pred_fallthru
      _
    // Predicated region
    $region54: #{tpu_custom_call.1} parent=1 // pred_check
      _
    $region55: #{tpu_custom_call.1} parent=1 // pred_check_branch
      %263 = sbr.rel (0) target = $region57
    $region56: #{tpu_custom_call.1} parent=1 // pred_region
      %265 = vsyncadd [#allocation13], 0
      %s267 = sshll.u32 [#allocation12], 4
      %s268 = int_to_ptr.vmem [resolvable:$true] %s267
      %s269 = sshll.u32 %s8, 4
      %s270 = int_to_ptr.hbm [resolvable:$true] %s269
      %272 = dma.vmem_to_hbm [thread:$0]  %s268, 16, %s270, [#allocation13]
    $region57: #{tpu_custom_call.1} parent=1 // pred_fallthru
      _
    // Predicated region
    $region58: #{tpu_custom_call.1} parent=1 // pred_check
      _
    $region59: #{tpu_custom_call.1} parent=1 // pred_check_branch
      %274 = sbr.rel (0) target = $region61
    $region60: #{tpu_custom_call.1} parent=1 // pred_region
      %276 = dma.done [#allocation4], 128
    $region61: #{tpu_custom_call.1} parent=1 // pred_fallthru
      _
    // Predicated region
    $region62: #{tpu_custom_call.1} parent=1 // pred_check
      _
    $region63: #{tpu_custom_call.1} parent=1 // pred_check_branch
      %278 = sbr.rel (0) target = $region65
    $region64: #{tpu_custom_call.1} parent=1 // pred_region
      %280 = dma.done [#allocation13], 16
    $region65: #{tpu_custom_call.1} parent=1 // pred_fallthru
      _
    %281 = vsyncpa [#allocation3], 1
    %282 = vsyncpa [#allocation6], 1
    %283 = vsyncpa [#allocation9], 1
    %284 = vsyncpa [#allocation4], 1
    %285 = vsyncpa [#allocation13], 1

// kernel: tpu_custom_call.1
$region0: #{tpu_custom_call.1}
  #allocation0 [shape = 'u32[]', space=smem, size = 0x4, offset = 0x4, fixed_abs, tag = 'smem constant byte address 0x4 - core index']
  #allocation1 [shape = 'u32[72,128]{1,0:T(1,128)}', space=vmem, size = 0x9000, scoped, tag = 'internal scratch']
  %s0 = inlined_call_operand.hbm [shape: f32[8,16], index: 0, kind: input, shape index: {}]
  %s1 = inlined_call_operand.hbm [shape: f32[8,8], index: 1, kind: input, shape index: {}]
  %s2 = inlined_call_operand.hbm [shape: f32[16,32], index: 2, kind: input, shape index: {}]
  %s3 = inlined_call_operand.hbm [shape: f32[8,32], index: 3, kind: input, shape index: {}]
  %s4 = inlined_call_operand.vmem [shape: f32[1,32], index: 4, kind: input, shape index: {}]
  %s5 = inlined_call_operand.hbm [shape: f32[32,32], index: 5, kind: input, shape index: {}]
  %s6 = inlined_call_operand.vmem [shape: f32[1,32], index: 6, kind: input, shape index: {}]
  %s7 = inlined_call_operand.hbm [shape: f32[8,16], index: 7, kind: output, shape index: {0}]
  %s8 = inlined_call_operand.vmem [shape: f32[8,1], index: 8, kind: output, shape index: {1}]
  %9 = xla_tuple %s7, %s8
  %s10 = sld [smem:[#allocation0]]
  $region66: #{tpu_custom_call.1} parent=0
    _
  %s12 = ssub.s32 1, %s10
  %s13 = scalar_select 0, %s12, %s10
  $region1: #{tpu_custom_call.1} parent=0
    #allocation2 [shape = 'u8[4096]{0}', space=vmem, size = 0x1000, scoped, tag = 'input window, operand 0, single buffered']
    #allocation3 [shape = 's32[1]{0}', space=sflag, size = 0x4, scoped, tag = 'scoped memory for tpu_custom_call.1']
    #allocation4 [shape = 's32[1]{0}', space=sflag, size = 0x4, scoped, tag = 'scoped memory for tpu_custom_call.1']
    #allocation5 [shape = 'u8[4096]{0}', space=vmem, size = 0x1000, scoped, tag = 'input window, operand 1, single buffered']
    #allocation6 [shape = 's32[1]{0}', space=sflag, size = 0x4, scoped, tag = 'scoped memory for tpu_custom_call.1']
    #allocation7 [shape = 'u8[8192]{0}', space=vmem, size = 0x2000, scoped, tag = 'input window, operand 2, single buffered']
    #allocation8 [shape = 'u8[4096]{0}', space=vmem, size = 0x1000, scoped, tag = 'input window, operand 3, single buffered']
    #allocation9 [shape = 's32[1]{0}', space=sflag, size = 0x4, scoped, tag = 'scoped memory for tpu_custom_call.1']
    #allocation10 [shape = 'u8[16384]{0}', space=vmem, size = 0x4000, scoped, tag = 'input window, operand 5, single buffered']
    #allocation11 [shape = 'u8[4096]{0}', space=vmem, size = 0x1000, scoped, tag = 'output window, operand 0, single buffered']
    %14 = vsyncpa [#allocation3], 0
    %15 = vsyncpa [#allocation6], 0
    %16 = vsyncpa [#allocation9], 0
    %17 = vsyncpa [#allocation4], 0
    // Predicated region
    $region2: #{tpu_custom_call.1} parent=1 // pred_check
      _
    $region3: #{tpu_custom_call.1} parent=1 // pred_check_branch
      %19 = sbr.rel (0) target = $region5
    $region4: #{tpu_custom_call.1} parent=1 // pred_region
      %21 = vsyncadd [#allocation3], 0
      %s23 = sshll.u32 %s0, 4
      %s24 = int_to_ptr.hbm [resolvable:$true] %s23
      %s25 = sshll.u32 [#allocation2], 4
      %s26 = int_to_ptr.vmem [resolvable:$true] %s25
      %28 = dma.hbm_to_vmem [thread:$0]  %s24, 128, %s26, [#allocation3]
    $region5: #{tpu_custom_call.1} parent=1 // pred_fallthru
      _
    // Predicated region
    $region6: #{tpu_custom_call.1} parent=1 // pred_check
      _
    $region7: #{tpu_custom_call.1} parent=1 // pred_check_branch
      %30 = sbr.rel (0) target = $region9
    $region8: #{tpu_custom_call.1} parent=1 // pred_region
      %32 = vsyncadd [#allocation6], 0
      %s34 = sshll.u32 %s1, 4
      %s35 = int_to_ptr.hbm [resolvable:$true] %s34
      %s36 = sshll.u32 [#allocation5], 4
      %s37 = int_to_ptr.vmem [resolvable:$true] %s36
      %39 = dma.hbm_to_vmem [thread:$0]  %s35, 128, %s37, [#allocation6]
    $region9: #{tpu_custom_call.1} parent=1 // pred_fallthru
      _
    // Predicated region
    $region10: #{tpu_custom_call.1} parent=1 // pred_check
      _
    $region11: #{tpu_custom_call.1} parent=1 // pred_check_branch
      %41 = sbr.rel (0) target = $region13
    $region12: #{tpu_custom_call.1} parent=1 // pred_region
      %43 = vsyncadd [#allocation6], 0
      %s44 = sshll.u32 %s2, 4
      %s45 = int_to_ptr.hbm [resolvable:$true] %s44
      %s46 = sshll.u32 [#allocation7], 4
      %s47 = int_to_ptr.vmem [resolvable:$true] %s46
      %52 = dma.hbm_to_vmem [thread:$0]  %s45, 256, %s47, [#allocation6], 128, 128, 8
    $region13: #{tpu_custom_call.1} parent=1 // pred_fallthru
      _
    // Predicated region
    $region14: #{tpu_custom_call.1} parent=1 // pred_check
      _
    $region15: #{tpu_custom_call.1} parent=1 // pred_check_branch
      %54 = sbr.rel (0) target = $region17
    $region16: #{tpu_custom_call.1} parent=1 // pred_region
      %56 = vsyncadd [#allocation9], 0
      %s58 = sshll.u32 %s3, 4
      %s59 = int_to_ptr.hbm [resolvable:$true] %s58
      %s60 = sshll.u32 [#allocation8], 4
      %s61 = int_to_ptr.vmem [resolvable:$true] %s60
      %63 = dma.hbm_to_vmem [thread:$0]  %s59, 128, %s61, [#allocation9]
    $region17: #{tpu_custom_call.1} parent=1 // pred_fallthru
      _
    // Predicated region
    $region18: #{tpu_custom_call.1} parent=1 // pred_check
      _
    $region19: #{tpu_custom_call.1} parent=1 // pred_check_branch
      %65 = sbr.rel (0) target = $region21
    $region20: #{tpu_custom_call.1} parent=1 // pred_region
      _
    $region21: #{tpu_custom_call.1} parent=1 // pred_fallthru
      _
    // Predicated region
    $region22: #{tpu_custom_call.1} parent=1 // pred_check
      _
    $region23: #{tpu_custom_call.1} parent=1 // pred_check_branch
      %67 = sbr.rel (0) target = $region25
    $region24: #{tpu_custom_call.1} parent=1 // pred_region
      %69 = vsyncadd [#allocation9], 0
      %s70 = sshll.u32 %s5, 4
      %s71 = int_to_ptr.hbm [resolvable:$true] %s70
      %s72 = sshll.u32 [#allocation10], 4
      %s73 = int_to_ptr.vmem [resolvable:$true] %s72
      %78 = dma.hbm_to_vmem [thread:$0]  %s71, 512, %s73, [#allocation9], 128, 128, 8
    $region25: #{tpu_custom_call.1} parent=1 // pred_fallthru
      _
    // Predicated region
    $region26: #{tpu_custom_call.1} parent=1 // pred_check
      _
    $region27: #{tpu_custom_call.1} parent=1 // pred_check_branch
      %80 = sbr.rel (0) target = $region29
    $region28: #{tpu_custom_call.1} parent=1 // pred_region
      _
    $region29: #{tpu_custom_call.1} parent=1 // pred_fallthru
      _
    // Predicated region
    $region30: #{tpu_custom_call.1} parent=1 // pred_check
      _
    $region31: #{tpu_custom_call.1} parent=1 // pred_check_branch
      %82 = sbr.rel (0) target = $region33
    $region32: #{tpu_custom_call.1} parent=1 // pred_region
      %84 = dma.done [#allocation3], 128
    $region33: #{tpu_custom_call.1} parent=1 // pred_fallthru
      _
    // Predicated region
    $region34: #{tpu_custom_call.1} parent=1 // pred_check
      _
    $region35: #{tpu_custom_call.1} parent=1 // pred_check_branch
      %86 = sbr.rel (0) target = $region37
    $region36: #{tpu_custom_call.1} parent=1 // pred_region
      %88 = dma.done [#allocation6], 128
    $region37: #{tpu_custom_call.1} parent=1 // pred_fallthru
      _
    // Predicated region
    $region38: #{tpu_custom_call.1} parent=1 // pred_check
      _
    $region39: #{tpu_custom_call.1} parent=1 // pred_check_branch
      %90 = sbr.rel (0) target = $region41
    $region40: #{tpu_custom_call.1} parent=1 // pred_region
      %92 = dma.done [#allocation6], 256
    $region41: #{tpu_custom_call.1} parent=1 // pred_fallthru
      _
    // Predicated region
    $region42: #{tpu_custom_call.1} parent=1 // pred_check
      _
    $region43: #{tpu_custom_call.1} parent=1 // pred_check_branch
      %94 = sbr.rel (0) target = $region45
    $region44: #{tpu_custom_call.1} parent=1 // pred_region
      %96 = dma.done [#allocation9], 128
    $region45: #{tpu_custom_call.1} parent=1 // pred_fallthru
      _
    // Predicated region
    $region46: #{tpu_custom_call.1} parent=1 // pred_check
      _
    $region47: #{tpu_custom_call.1} parent=1 // pred_check_branch
      %98 = sbr.rel (0) target = $region49
    $region48: #{tpu_custom_call.1} parent=1 // pred_region
      %100 = dma.done [#allocation9], 512
    $region49: #{tpu_custom_call.1} parent=1 // pred_fallthru
      _
    %v101 = vld [vmem:[#allocation2] sm:$0xff]
    %v102 = vld [vmem:[#allocation7] sm:$0xff]
    %v103 = vld [vmem:[#allocation7 + $0x8] sm:$0xff]
    %v104 = vld [vmem:[#allocation5] sm:$0xff]
    %v105 = vld [vmem:[#allocation8] sm:$0xff]
    %vm106 = vcmask 64512
    %v108 = vsel %vm106, %v104, 0
    %110 = vmatpush.msra.mxu0 0.0
    %111 = vmatpush.msra.mxu0 0.0
    %112 = vmatpush.msra.mxu0 0.0
    %113 = vmatpush.msra.mxu0 0.0
    %114 = vmatpush.msra.mxu0 0.0
    %115 = vmatpush.msra.mxu0 0.0
    %116 = vmatpush.msra.mxu0 0.0
    %117 = vmatpush.msra.mxu0 0.0
    %118 = vmatpush.msra.mxu0 0.0
    %119 = vmatpush.msra.mxu0 0.0
    %120 = vmatpush.msra.mxu0 0.0
    %121 = vmatpush.msra.mxu0 0.0
    %122 = vmatpush.msra.mxu0 0.0
    %123 = vmatpush.msra.mxu0 0.0
    %124 = vmatpush.msra.mxu0 0.0
    %125 = vmatpush.msra.mxu0 %v105
    %126 = vmatmul.f32.gmra.mxu0 %v108
    %v127 = vpop.f32.mrf.mxu0
    %v128 = vadd.f32 0.0, %v127
    %129 = vdwg.mxu0
    %vm130 = vcmask 130048
    %v132 = vsel %vm130, %v101, 0
    %134 = vmatpush.msra.mxu0 0.0
    %135 = vmatpush.msra.mxu0 0.0
    %136 = vmatpush.msra.mxu0 0.0
    %137 = vmatpush.msra.mxu0 0.0
    %138 = vmatpush.msra.mxu0 0.0
    %139 = vmatpush.msra.mxu0 0.0
    %140 = vmatpush.msra.mxu0 0.0
    %141 = vmatpush.msra.mxu0 0.0
    %142 = vmatpush.msra.mxu0 0.0
    %143 = vmatpush.msra.mxu0 0.0
    %144 = vmatpush.msra.mxu0 0.0
    %145 = vmatpush.msra.mxu0 0.0
    %146 = vmatpush.msra.mxu0 0.0
    %147 = vmatpush.msra.mxu0 0.0
    %148 = vmatpush.msra.mxu0 %v103
    %149 = vmatpush.msra.mxu0 %v102
    %150 = vmatmul.f32.gmra.mxu0 %v132
    %v151 = vpop.f32.mrf.mxu0
    %v152 = vadd.f32 %v128, %v151
    %153 = vdwg.mxu0
    %v154 = vld [vmem:[%s4] sm:$0x1]
    %v156 = vperm.slane %v154, 0
    %v158 = vadd.f32 %v152, %v156
    %v159 = vmax.f32 %v158, 0.0
    %v160 = vld [vmem:[#allocation10] sm:$0xff]
    %v161 = vld [vmem:[#allocation10 + $0x8] sm:$0xff]
    %v162 = vld [vmem:[#allocation10 + $0x10] sm:$0xff]
    %v163 = vld [vmem:[#allocation10 + $0x18] sm:$0xff]
    %v164 = vld [vmem:[%s6] sm:$0x1]
    %v166 = vperm.slane %v164, 0
    %vm168 = vcmask 261120
    %v170 = vsel %vm168, %v159, 0
    %172 = vmatpush.msra.mxu0 0.0
    %173 = vmatpush.msra.mxu0 0.0
    %174 = vmatpush.msra.mxu0 0.0
    %175 = vmatpush.msra.mxu0 0.0
    %176 = vmatpush.msra.mxu0 0.0
    %177 = vmatpush.msra.mxu0 0.0
    %178 = vmatpush.msra.mxu0 0.0
    %179 = vmatpush.msra.mxu0 0.0
    %180 = vmatpush.msra.mxu0 0.0
    %181 = vmatpush.msra.mxu0 0.0
    %182 = vmatpush.msra.mxu0 0.0
    %183 = vmatpush.msra.mxu0 0.0
    %184 = vmatpush.msra.mxu0 %v163
    %185 = vmatpush.msra.mxu0 %v162
    %186 = vmatpush.msra.mxu0 %v161
    %187 = vmatpush.msra.mxu0 %v160
    %188 = vmatmul.f32.gmra.mxu0 %v170
    %v189 = vpop.f32.mrf.mxu0
    %v190 = vadd.f32 %v166, %v189
    %191 = vdwg.mxu0
    %v192 = vand.u32 2147483647, %v190
    %v193 = vsub.f32 0.0, %v192
    %v194 = vmul.f32 %v193, 1.442695
    %v195 = vpow.pop %v194
    %v196 = vadd.f32 %v195, 1.0
    %v197 = vrcp.pop %v196
    %v198 = vmul.f32 %v196, %v197
    %v199 = vsub.f32 1.0, %v198
    %v200 = vmul.f32 %v197, %v199
    %v201 = vadd.f32 %v197, %v200
    %vm202 = vweird.f32 %v196
    %vm203 = vweird.f32 %v197
    %vm204 = vmor %vm202, %vm203
    %v205 = vsel %vm204, %v197, %v201
    %v206 = vand.u32 2147483647, %v196
    %vm207 = vcmp.eq.f32.partialorder %v206, 8.507059e+37
    %v208 = vand.u32 %v196, 2147483648
    %v209 = vor.u32 1.1754944e-38, %v208
    %v210 = vsel %vm207, %v209, %v205
    %v211 = vmul.f32 1.0, %v210
    %vm212 = vcmp.ge.f32.partialorder %v190, 0.0
    %v213 = vmul.f32 %v195, %v211
    %v214 = vsel %vm212, %v211, %v213
    %215 = vrot.lane.b32.xlu0 %v101, 16
    %v216 = vpop.permute.xlu0 %215
    %v218 = vmul.f32 %v214, %v216
    %v219 = vsub.f32 1.0, %v214
    %221 = vrot.lane.b32.xlu0 %v190, 16
    %v222 = vpop.permute.xlu0 %221
    %v224 = vmul.f32 %v219, %v222
    %v225 = vadd.f32 %v218, %v224
    %227 = vrot.lane.b32.xlu0 %v225, 112
    %v228 = vpop.permute.xlu0 %227
    %230 = vst.msk [vmem:[#allocation11] sm:$0xff] %vm130, %v228
    %v231 = vsub.f32 0.0, %v190
    %v232 = vmax.f32 %v231, 0.0
    %v233 = vlog2.pop %v196
    %v234 = vmul.f32 %v233, 0.6931472
    %v235 = vadd.f32 %v232, %v234
    %237 = vrot.lane.b32.xlu0 %v235, 112
    %v238 = vpop.permute.xlu0 %237
    %v240 = vsel %vm130, %v238, 0.0
    %241 = vadd.xlane.f32.xlu0 %v240
    %v242 = vpop.xlane.xlu0 %241
    %vm243 = vcmask 7168
    %244 = vst.msk [vmem:[%s8] sm:$0xff] %vm243, %v242
    // Predicated region
    $region50: #{tpu_custom_call.1} parent=1 // pred_check
      _
    $region51: #{tpu_custom_call.1} parent=1 // pred_check_branch
      %246 = sbr.rel (0) target = $region53
    $region52: #{tpu_custom_call.1} parent=1 // pred_region
      %248 = vsyncadd [#allocation4], 0
      %s250 = sshll.u32 [#allocation11], 4
      %s251 = int_to_ptr.vmem [resolvable:$true] %s250
      %s252 = sshll.u32 %s7, 4
      %s253 = int_to_ptr.hbm [resolvable:$true] %s252
      %255 = dma.vmem_to_hbm [thread:$0]  %s251, 128, %s253, [#allocation4]
    $region53: #{tpu_custom_call.1} parent=1 // pred_fallthru
      _
    // Predicated region
    $region54: #{tpu_custom_call.1} parent=1 // pred_check
      _
    $region55: #{tpu_custom_call.1} parent=1 // pred_check_branch
      %257 = sbr.rel (0) target = $region57
    $region56: #{tpu_custom_call.1} parent=1 // pred_region
      _
    $region57: #{tpu_custom_call.1} parent=1 // pred_fallthru
      _
    // Predicated region
    $region58: #{tpu_custom_call.1} parent=1 // pred_check
      _
    $region59: #{tpu_custom_call.1} parent=1 // pred_check_branch
      %259 = sbr.rel (0) target = $region61
    $region60: #{tpu_custom_call.1} parent=1 // pred_region
      %261 = dma.done [#allocation4], 128
    $region61: #{tpu_custom_call.1} parent=1 // pred_fallthru
      _
    // Predicated region
    $region62: #{tpu_custom_call.1} parent=1 // pred_check
      _
    $region63: #{tpu_custom_call.1} parent=1 // pred_check_branch
      %263 = sbr.rel (0) target = $region65
    $region64: #{tpu_custom_call.1} parent=1 // pred_region
      _
    $region65: #{tpu_custom_call.1} parent=1 // pred_fallthru
      _
    %264 = vsyncpa [#allocation3], 1
    %265 = vsyncpa [#allocation6], 1
    %266 = vsyncpa [#allocation9], 1
    %267 = vsyncpa [#allocation4], 1

</llo_original>
